<compile_context>
chip_gen: v7x
topology: tpu7x:2x2x1
jax: 0.10.0
libtpu: 0.0.40
codegen_flags: <defaults>
</compile_context>

<pallas_src>
from functools import partial

import jax
import jax.numpy as jnp
from jax import lax
from jax.experimental import pallas as pl
from jax.experimental.pallas import tpu as pltpu

FC_OUT = 64    # nn.Linear(lstm_hidden, 64)
FC_PAD = 128   # lane-dense store width; wrapper slices back to FC_OUT


def _ppg_fused_kernel(xs_ref, w1_ref, b1_ref, w2_ref, b2_ref,
                      wih_ref, whh_ref, bl_ref, wfc_ref, bfc_ref,
                      o_ref,
                      slab2_ref, xw_ref):
    # xs_ref : (T, bb, K*D) bf16 -- conv1 im2col slab (built in the wrapper; x is tiny).
    # w1_ref : (K*D, C) bf16, w2_ref: (K*C, C) bf16   (im2col-ordered conv weights)
    # wih/whh: (C,4H)/(H,4H) bf16 with gate columns ordered i|f|o|g; bl = b_ih+b_hh (f32).
    # wfc    : (H, FC_PAD) bf16 (zero-padded 64->128); o_ref: (bb, FC_PAD) f32.
    f32, bf16 = jnp.float32, jnp.bfloat16
    T, bb, KD = xs_ref.shape
    C = w1_ref.shape[1]
    KC = w2_ref.shape[0]
    K = KC // C
    pad = (K - 1) // 2
    H = whh_ref.shape[0]
    T1 = T // 2            # after pool1 (floor, like MaxPool1d(2,2))
    T2 = T1 // 2           # after pool2

    # ---------------- conv1: single im2col matmul + ReLU + MaxPool(2,2) ----------------
    acc1 = jnp.dot(xs_ref[...].reshape(T * bb, KD), w1_ref[...],
                   preferred_element_type=f32)
    acc1 = jnp.maximum(acc1 + b1_ref[...], 0.0)
    # MaxPool1d(2,2): pair time steps on a leading axis, elementwise max (pure VALU).
    y1 = acc1[:2 * T1 * bb].reshape(T1, 2, bb, C)
    pool1 = jnp.maximum(y1[:, 0], y1[:, 1])                    # (T1, bb, C) f32

    # ---------------- conv2: im2col via direct scratch writes + split matmul ----------------
    # Zero only the halo rows (first/last `pad` rows); the rest is fully overwritten below.
    zr = min(pad, T1)
    if zr > 0:
        halo = jnp.zeros((zr, bb, KC), bf16)
        slab2_ref[:zr] = halo
        slab2_ref[T1 - zr:] = halo
    p1_bf = pool1.astype(bf16)
    for k in range(K):                    # K=5 static taps; time-shifted 64-lane-window stores
        off = k - pad
        L = T1 - abs(off)
        if L > 0:
            src = max(0, off)
            dst = max(0, -off)
            slab2_ref[dst:dst + L, :, k * C:(k + 1) * C] = p1_bf[src:src + L]

    slab2 = slab2_ref[...].reshape(T1 * bb, KC)
    w2 = w2_ref[...]
    split = (KC // 256) * 256             # align first pass to the 256-deep MXU (v6e/v7x)
    if 0 < split < KC:
        acc2 = (jnp.dot(slab2[:, :split], w2[:split], preferred_element_type=f32)
                + jnp.dot(slab2[:, split:], w2[split:], preferred_element_type=f32))
    else:
        acc2 = jnp.dot(slab2, w2, preferred_element_type=f32)
    acc2 = jnp.maximum(acc2 + b2_ref[...], 0.0)
    y2 = acc2[:2 * T2 * bb].reshape(T2, 2, bb, C)
    pool2 = jnp.maximum(y2[:, 0], y2[:, 1])                    # (T2, bb, C) f32

    # ---------------- LSTM (batch_first, last step) + Linear ----------------
    # Input projection hoisted out of the recurrence: one fat matmul over all steps,
    # stashed (with the folded bias) in VMEM scratch and indexed per step.
    xw = jnp.dot(pool2.reshape(T2 * bb, C).astype(bf16), wih_ref[...],
                 preferred_element_type=f32) + bl_ref[...]
    xw_ref[...] = xw.reshape(T2, bb, 4 * H)

    whh = whh_ref[...]                                         # (H, 4H) bf16, loop-invariant

    def lstm_step(t, carry):
        h, c = carry                                           # (bb, H) f32 each
        gates = xw_ref[t] + jnp.dot(h.astype(bf16), whh,
                                    preferred_element_type=f32)  # (bb, 4H), order i|f|o|g
        sg = jax.nn.sigmoid(gates[:, :3 * H])                  # one 3H-wide EUP op (i,f,o)
        g_g = jnp.tanh(gates[:, 3 * H:])                       # one H-wide EUP op (g)
        i_g = sg[:, :H]
        f_g = sg[:, H:2 * H]
        o_g = sg[:, 2 * H:]
        c_new = f_g * c + i_g * g_g
        h_new = o_g * jnp.tanh(c_new)
        return h_new, c_new

    h0 = jnp.zeros((bb, H), f32)
    c0 = jnp.zeros((bb, H), f32)
    unroll = 4 if bb <= 32 else 2          # more unroll at small bb; cap vreg pressure at big bb
    h_last, _ = lax.fori_loop(0, T2, lstm_step, (h0, c0), unroll=unroll)

    out = jnp.dot(h_last.astype(bf16), wfc_ref[...],
                  preferred_element_type=f32) + bfc_ref[...]
    o_ref[...] = out.astype(o_ref.dtype)                       # dense 128-lane store


def _full_spec(a):
    return pl.BlockSpec(a.shape, lambda i: (0,) * a.ndim)


def _default_tile_config():
    """Pick (batch tile, vmem limit) per TPU generation."""
    vmem_cap = None
    try:
        info = pltpu.get_tpu_info()
        vmem_cap = getattr(info, "vmem_capacity_bytes", None)
    except Exception:
        vmem_cap = None
    if vmem_cap is None:
        vmem_cap = 64 * 1024 * 1024                     # conservative (v7x per-TC)
    if vmem_cap >= 100 * 1024 * 1024:                   # v5e / v6e: 128 MiB physical VMEM
        return 64, 96 * 1024 * 1024
    return 32, 48 * 1024 * 1024                         # v7x: 64 MiB per TensorCore


@partial(jax.jit, static_argnames=("bb", "vmem_limit_bytes"))
def _ppg_forward_jit(x, params, *, bb, vmem_limit_bytes):
    bf16 = jnp.bfloat16
    B, T, D = x.shape
    K, Din, C = params["conv1_w"].shape
    H = params["w_hh"].shape[0]
    pad = (K - 1) // 2
    T1 = T // 2
    T2 = T1 // 2
    assert T >= 4, "need at least one LSTM step after two MaxPool(2,2)"

    Bp = ((B + bb - 1) // bb) * bb
    nb = Bp // bb

    # conv1 im2col in the wrapper: x is tiny (K*D = 10 lanes), so DMA-ing the slab
    # costs almost nothing and the kernel issues a single MXU matmul for conv1.
    x_t = jnp.transpose(x, (1, 0, 2)).astype(bf16)                  # time-leading (T, B, D)
    x_p = jnp.pad(x_t, ((pad, pad), (0, Bp - B), (0, 0)))           # 'same' pad + batch pad
    xs = jnp.concatenate([x_p[k:k + T] for k in range(K)], axis=-1)  # (T, Bp, K*D) bf16

    # Weights cast to bf16 / im2col-reshaped once here (not per grid iteration).
    w1 = params["conv1_w"].reshape(K * Din, C).astype(bf16)
    w2 = params["conv2_w"].reshape(K * C, C).astype(bf16)
    wih = params["w_ih"].astype(bf16)
    whh = params["w_hh"].astype(bf16)
    wfc = params["w_fc"].astype(bf16)
    b1, b2 = params["conv1_b"], params["conv2_b"]
    bl, bfc = params["b_lstm"], params["b_fc"]

    grid_spec = pltpu.PrefetchScalarGridSpec(
        num_scalar_prefetch=0,
        grid=(nb,),
        in_specs=[
            pl.BlockSpec((T, bb, K * Din), lambda i: (0, i, 0)),    # conv1 slab, blocked on batch
            _full_spec(w1), _full_spec(b1),
            _full_spec(w2), _full_spec(b2),
            _full_spec(wih), _full_spec(whh), _full_spec(bl),
            _full_spec(wfc), _full_spec(bfc),
        ],
        out_specs=pl.BlockSpec((bb, FC_PAD), lambda i: (i, 0)),
        scratch_shapes=[
            pltpu.VMEM((T1, bb, K * C), jnp.bfloat16),              # conv2 im2col slab
            pltpu.VMEM((T2, bb, 4 * H), jnp.float32),               # hoisted x@W_ih (+ bias)
        ],
    )

    out = pl.pallas_call(
        _ppg_fused_kernel,
        out_shape=jax.ShapeDtypeStruct((Bp, FC_PAD), jnp.float32),
        grid_spec=grid_spec,
        compiler_params=pltpu.CompilerParams(
            dimension_semantics=("parallel",),                      # batch blocks -> 2 TCs on v7x
            vmem_limit_bytes=vmem_limit_bytes,
        ),
    )(xs, w1, b1, w2, b2, wih, whh, bl, wfc, bfc)

    return out[:B, :FC_OUT]


def ppg_encoder_forward(x, params, *, block_batch=None, vmem_limit_bytes=None):
    """x: (B, T, input_dim) -> (B, 64); same semantics as PPGEncoder.forward."""
    bb_auto, vmem_auto = _default_tile_config()
    bb = block_batch if block_batch else bb_auto
    vmem = vmem_limit_bytes if vmem_limit_bytes else vmem_auto
    B = x.shape[0]
    # Don't pad a tiny batch up to a huge tile; keep bb a multiple of 8 (sublanes).
    bb = int(max(8, min(bb, ((B + 7) // 8) * 8)))
    return _ppg_forward_jit(x, params, bb=bb, vmem_limit_bytes=int(vmem))


def init_params(key, input_dim=2, cnn_channels=64, lstm_hidden=64, k=5):
    ks = jax.random.split(key, 9)
    s = 0.1
    f32, bf16 = jnp.float32, jnp.bfloat16
    w_fc = s * jax.random.normal(ks[7], (lstm_hidden, FC_OUT), f32)
    b_fc = s * jax.random.normal(ks[8], (1, FC_OUT), f32)
    return dict(
        # Conv weights stored (K, Cin, Cout) == PyTorch (Cout, Cin, K) transposed; bf16.
        conv1_w=(s * jax.random.normal(ks[0], (k, input_dim, cnn_channels), f32)).astype(bf16),
        conv1_b=s * jax.random.normal(ks[1], (1, cnn_channels), f32),
        conv2_w=(s * jax.random.normal(ks[2], (k, cnn_channels, cnn_channels), f32)).astype(bf16),
        conv2_b=s * jax.random.normal(ks[3], (1, cnn_channels), f32),
        # LSTM weights stored (in, 4H), bf16, gate columns ordered i|f|o|g.
        # (When importing from PyTorch -- order i|f|g|o -- permute the last two H-blocks
        #  of W_ih, W_hh and the folded bias consistently.)  b_lstm = b_ih + b_hh.
        w_ih=(s * jax.random.normal(ks[4], (cnn_channels, 4 * lstm_hidden), f32)).astype(bf16),
        w_hh=(s * jax.random.normal(ks[5], (lstm_hidden, 4 * lstm_hidden), f32)).astype(bf16),
        b_lstm=s * jax.random.normal(ks[6], (1, 4 * lstm_hidden), f32),
        # FC zero-padded FC_OUT -> FC_PAD for a lane-dense output store; bf16.
        w_fc=jnp.zeros((lstm_hidden, FC_PAD), f32).at[:, :FC_OUT].set(w_fc).astype(bf16),
        b_fc=jnp.zeros((1, FC_PAD), f32).at[:, :FC_OUT].set(b_fc),
    )


def _reference_forward(x, params):
    """Pure-JAX f32 reference with identical weight layout / gate order."""
    f32 = jnp.float32
    w1 = params["conv1_w"].astype(f32)
    w2 = params["conv2_w"].astype(f32)
    wih = params["w_ih"].astype(f32)
    whh = params["w_hh"].astype(f32)
    wfc = params["w_fc"].astype(f32)
    b1, b2 = params["conv1_b"], params["conv2_b"]
    bl, bfc = params["b_lstm"], params["b_fc"]
    K = w1.shape[0]
    H = whh.shape[0]
    pad = (K - 1) // 2

    def conv_relu_pool(z, w, b):            # z: (B, T, Cin), w: (K, Cin, Cout)
        Tz = z.shape[1]
        zp = jnp.pad(z, ((0, 0), (pad, pad), (0, 0)))
        out = sum(jnp.einsum("btc,cd->btd", zp[:, j:j + Tz], w[j]) for j in range(K)) + b
        out = jnp.maximum(out, 0.0)
        Tp = Tz // 2
        return out[:, :2 * Tp].reshape(z.shape[0], Tp, 2, -1).max(axis=2)

    z = conv_relu_pool(x.astype(f32), w1, b1)
    z = conv_relu_pool(z, w2, b2)

    Bz = z.shape[0]

    def step(carry, xt):
        h, c = carry
        g = xt @ wih + bl[0] + h @ whh       # gate order i|f|o|g
        sg = jax.nn.sigmoid(g[:, :3 * H])
        gg = jnp.tanh(g[:, 3 * H:])
        i, f, o = sg[:, :H], sg[:, H:2 * H], sg[:, 2 * H:]
        c = f * c + i * gg
        h = o * jnp.tanh(c)
        return (h, c), None

    h0 = jnp.zeros((Bz, H), f32)
    c0 = jnp.zeros((Bz, H), f32)
    (h, _), _ = lax.scan(step, (h0, c0), jnp.transpose(z, (1, 0, 2)))
    return (h @ wfc + bfc)[:, :FC_OUT]


if __name__ == "__main__":
    key = jax.random.PRNGKey(0)
    k_x, k_p = jax.random.split(key)

    B, T, D = 2, 16, 2        # small analogue of the (batch, 250, 2) PPG input
    x = jax.random.normal(k_x, (B, T, D), jnp.float32)
    params = init_params(k_p, input_dim=D, cnn_channels=64, lstm_hidden=64, k=5)

    out = ppg_encoder_forward(x, params)
    out = jax.block_until_ready(out)

    assert out.shape == (B, FC_OUT), out.shape
    assert bool(jnp.all(jnp.isfinite(out)))

    ref = _reference_forward(x, params)
    max_err = float(jnp.max(jnp.abs(out - ref)))
    assert max_err < 5e-2, f"kernel vs reference max abs err {max_err}"

    print("KERNEL_OK")
</pallas_src>

<mosaic_0001>
module attributes {stable_mosaic.version = 11 : i64} {
  func.func @_ppg_fused_kernel(%arg0: i32, %arg1: memref<16x8x10xbf16, #tpu.memory_space<vmem>>, %arg2: memref<10x64xbf16, #tpu.memory_space<vmem>>, %arg3: memref<1x64xf32, #tpu.memory_space<vmem>>, %arg4: memref<320x64xbf16, #tpu.memory_space<vmem>>, %arg5: memref<1x64xf32, #tpu.memory_space<vmem>>, %arg6: memref<64x256xbf16, #tpu.memory_space<vmem>>, %arg7: memref<64x256xbf16, #tpu.memory_space<vmem>>, %arg8: memref<1x256xf32, #tpu.memory_space<vmem>>, %arg9: memref<64x128xbf16, #tpu.memory_space<vmem>>, %arg10: memref<1x128xf32, #tpu.memory_space<vmem>>, %arg11: memref<8x128xf32, #tpu.memory_space<vmem>>, %arg12: memref<8x8x320xbf16, #tpu.memory_space<vmem>>, %arg13: memref<4x8x256xf32, #tpu.memory_space<vmem>>) attributes {dimension_semantics = [#tpu.dimension_semantics<parallel>], iteration_bounds = array<i64: 1>, scalar_prefetch = 0 : i64, scratch_operands = 2 : i64, tpu.core_type = #tpu.core_type<tc>, window_params = [{transform_indices = @transform_0, window_bounds = array<i64: 16, 8, 10>}, {pipeline_mode = #tpu.pipeline_mode<synchronous>, transform_indices = @transform_1, window_bounds = array<i64: 10, 64>}, {pipeline_mode = #tpu.pipeline_mode<synchronous>, transform_indices = @transform_2, window_bounds = array<i64: 1, 64>}, {pipeline_mode = #tpu.pipeline_mode<synchronous>, transform_indices = @transform_3, window_bounds = array<i64: 320, 64>}, {pipeline_mode = #tpu.pipeline_mode<synchronous>, transform_indices = @transform_4, window_bounds = array<i64: 1, 64>}, {pipeline_mode = #tpu.pipeline_mode<synchronous>, transform_indices = @transform_5, window_bounds = array<i64: 64, 256>}, {pipeline_mode = #tpu.pipeline_mode<synchronous>, transform_indices = @transform_6, window_bounds = array<i64: 64, 256>}, {pipeline_mode = #tpu.pipeline_mode<synchronous>, transform_indices = @transform_7, window_bounds = array<i64: 1, 256>}, {pipeline_mode = #tpu.pipeline_mode<synchronous>, transform_indices = @transform_8, window_bounds = array<i64: 64, 128>}, {pipeline_mode = #tpu.pipeline_mode<synchronous>, transform_indices = @transform_9, window_bounds = array<i64: 1, 128>}, {transform_indices = @transform_10, window_bounds = array<i64: 8, 128>}]} {
    %c0 = arith.constant 0 : index
    %c0_0 = arith.constant 0 : index
    %c0_1 = arith.constant 0 : index
    %0 = vector.load %arg1[%c0, %c0_0, %c0_1] : memref<16x8x10xbf16, #tpu.memory_space<vmem>>, vector<16x8x10xbf16>
    %1 = vector.shape_cast %0 : vector<16x8x10xbf16> to vector<128x10xbf16>
    %c0_2 = arith.constant 0 : index
    %c0_3 = arith.constant 0 : index
    %2 = vector.load %arg2[%c0_2, %c0_3] : memref<10x64xbf16, #tpu.memory_space<vmem>>, vector<10x64xbf16>
    %cst = arith.constant dense<0.000000e+00> : vector<128x64xf32>
    %3 = tpu.matmul %1, %2, %cst {dimension_numbers = #tpu.dot_dimension_numbers<[1], [0], [0], [1], [0, 0, 1, 1], [], []>} : vector<128x10xbf16>, vector<10x64xbf16>, vector<128x64xf32> -> vector<128x64xf32>
    %c0_4 = arith.constant 0 : index
    %c0_5 = arith.constant 0 : index
    %4 = vector.load %arg3[%c0_4, %c0_5] : memref<1x64xf32, #tpu.memory_space<vmem>>, vector<1x64xf32>
    %5 = vector.broadcast %4 : vector<1x64xf32> to vector<128x64xf32>
    %6 = arith.addf %3, %5 : vector<128x64xf32>
    %cst_6 = arith.constant 0.000000e+00 : f32
    %7 = vector.broadcast %cst_6 : f32 to vector<128x64xf32>
    %8 = arith.maximumf %6, %7 : vector<128x64xf32>
    %9 = vector.shape_cast %8 : vector<128x64xf32> to vector<8x2x8x64xf32>
    %10 = vector.extract_strided_slice %9 {offsets = [0, 0, 0, 0], sizes = [8, 1, 8, 64], strides = [1, 1, 1, 1]} : vector<8x2x8x64xf32> to vector<8x1x8x64xf32>
    %11 = vector.shape_cast %10 : vector<8x1x8x64xf32> to vector<8x8x64xf32>
    %12 = vector.extract_strided_slice %9 {offsets = [0, 1, 0, 0], sizes = [8, 1, 8, 64], strides = [1, 1, 1, 1]} : vector<8x2x8x64xf32> to vector<8x1x8x64xf32>
    %13 = vector.shape_cast %12 : vector<8x1x8x64xf32> to vector<8x8x64xf32>
    %14 = arith.maximumf %11, %13 : vector<8x8x64xf32>
    %cst_7 = arith.constant 0.000000e+00 : bf16
    %15 = vector.broadcast %cst_7 : bf16 to vector<2x8x320xbf16>
    %c0_8 = arith.constant 0 : index
    %c0_9 = arith.constant 0 : index
    %c0_10 = arith.constant 0 : index
    %16 = vector.load %arg12[%c0_8, %c0_9, %c0_10] : memref<8x8x320xbf16, #tpu.memory_space<vmem>>, vector<2x8x320xbf16>
    tpu.vector_store %arg12[%c0_8, %c0_9, %c0_10], %15 {strides = array<i32>} : memref<8x8x320xbf16, #tpu.memory_space<vmem>>, vector<2x8x320xbf16>,
    %c6 = arith.constant 6 : index
    %c0_11 = arith.constant 0 : index
    %c0_12 = arith.constant 0 : index
    %17 = vector.load %arg12[%c6, %c0_11, %c0_12] : memref<8x8x320xbf16, #tpu.memory_space<vmem>>, vector<2x8x320xbf16>
    tpu.vector_store %arg12[%c6, %c0_11, %c0_12], %15 {strides = array<i32>} : memref<8x8x320xbf16, #tpu.memory_space<vmem>>, vector<2x8x320xbf16>,
    %18 = arith.truncf %14 : vector<8x8x64xf32> to vector<8x8x64xbf16>
    %19 = vector.extract_strided_slice %18 {offsets = [0, 0, 0], sizes = [6, 8, 64], strides = [1, 1, 1]} : vector<8x8x64xbf16> to vector<6x8x64xbf16>
    %c2 = arith.constant 2 : index
    %c0_13 = arith.constant 0 : index
    %c0_14 = arith.constant 0 : index
    %20 = vector.load %arg12[%c2, %c0_13, %c0_14] : memref<8x8x320xbf16, #tpu.memory_space<vmem>>, vector<6x8x64xbf16>
    tpu.vector_store %arg12[%c2, %c0_13, %c0_14], %19 {strides = array<i32>} : memref<8x8x320xbf16, #tpu.memory_space<vmem>>, vector<6x8x64xbf16>,
    %21 = vector.extract_strided_slice %18 {offsets = [0, 0, 0], sizes = [7, 8, 64], strides = [1, 1, 1]} : vector<8x8x64xbf16> to vector<7x8x64xbf16>
    %c1 = arith.constant 1 : index
    %c0_15 = arith.constant 0 : index
    %c64 = arith.constant 64 : index
    %22 = vector.load %arg12[%c1, %c0_15, %c64] : memref<8x8x320xbf16, #tpu.memory_space<vmem>>, vector<7x8x64xbf16>
    tpu.vector_store %arg12[%c1, %c0_15, %c64], %21 {strides = array<i32>} : memref<8x8x320xbf16, #tpu.memory_space<vmem>>, vector<7x8x64xbf16>,
    %c0_16 = arith.constant 0 : index
    %c0_17 = arith.constant 0 : index
    %c128 = arith.constant 128 : index
    %23 = vector.load %arg12[%c0_16, %c0_17, %c128] : memref<8x8x320xbf16, #tpu.memory_space<vmem>>, vector<8x8x64xbf16>
    tpu.vector_store %arg12[%c0_16, %c0_17, %c128], %18 {strides = array<i32>} : memref<8x8x320xbf16, #tpu.memory_space<vmem>>, vector<8x8x64xbf16>,
    %24 = vector.extract_strided_slice %18 {offsets = [1, 0, 0], sizes = [7, 8, 64], strides = [1, 1, 1]} : vector<8x8x64xbf16> to vector<7x8x64xbf16>
    %c0_18 = arith.constant 0 : index
    %c0_19 = arith.constant 0 : index
    %c192 = arith.constant 192 : index
    %25 = vector.load %arg12[%c0_18, %c0_19, %c192] : memref<8x8x320xbf16, #tpu.memory_space<vmem>>, vector<7x8x64xbf16>
    tpu.vector_store %arg12[%c0_18, %c0_19, %c192], %24 {strides = array<i32>} : memref<8x8x320xbf16, #tpu.memory_space<vmem>>, vector<7x8x64xbf16>,
    %26 = vector.extract_strided_slice %18 {offsets = [2, 0, 0], sizes = [6, 8, 64], strides = [1, 1, 1]} : vector<8x8x64xbf16> to vector<6x8x64xbf16>
    %c0_20 = arith.constant 0 : index
    %c0_21 = arith.constant 0 : index
    %c256 = arith.constant 256 : index
    %27 = vector.load %arg12[%c0_20, %c0_21, %c256] : memref<8x8x320xbf16, #tpu.memory_space<vmem>>, vector<6x8x64xbf16>
    tpu.vector_store %arg12[%c0_20, %c0_21, %c256], %26 {strides = array<i32>} : memref<8x8x320xbf16, #tpu.memory_space<vmem>>, vector<6x8x64xbf16>,
    %c0_22 = arith.constant 0 : index
    %c0_23 = arith.constant 0 : index
    %c0_24 = arith.constant 0 : index
    %28 = vector.load %arg12[%c0_22, %c0_23, %c0_24] : memref<8x8x320xbf16, #tpu.memory_space<vmem>>, vector<8x8x320xbf16>
    %29 = vector.shape_cast %28 : vector<8x8x320xbf16> to vector<64x320xbf16>
    %c0_25 = arith.constant 0 : index
    %c0_26 = arith.constant 0 : index
    %30 = vector.load %arg4[%c0_25, %c0_26] : memref<320x64xbf16, #tpu.memory_space<vmem>>, vector<320x64xbf16>
    %31 = vector.extract_strided_slice %29 {offsets = [0, 0], sizes = [64, 256], strides = [1, 1]} : vector<64x320xbf16> to vector<64x256xbf16>
    %32 = vector.extract_strided_slice %30 {offsets = [0, 0], sizes = [256, 64], strides = [1, 1]} : vector<320x64xbf16> to vector<256x64xbf16>
    %cst_27 = arith.constant dense<0.000000e+00> : vector<64x64xf32>
    %33 = tpu.matmul %31, %32, %cst_27 {dimension_numbers = #tpu.dot_dimension_numbers<[1], [0], [0], [1], [0, 0, 1, 1], [], []>} : vector<64x256xbf16>, vector<256x64xbf16>, vector<64x64xf32> -> vector<64x64xf32>
    %34 = vector.extract_strided_slice %29 {offsets = [0, 256], sizes = [64, 64], strides = [1, 1]} : vector<64x320xbf16> to vector<64x64xbf16>
    %35 = vector.extract_strided_slice %30 {offsets = [256, 0], sizes = [64, 64], strides = [1, 1]} : vector<320x64xbf16> to vector<64x64xbf16>
    %cst_28 = arith.constant dense<0.000000e+00> : vector<64x64xf32>
    %36 = tpu.matmul %34, %35, %cst_28 {dimension_numbers = #tpu.dot_dimension_numbers<[1], [0], [0], [1], [0, 0, 1, 1], [], []>} : vector<64x64xbf16>, vector<64x64xbf16>, vector<64x64xf32> -> vector<64x64xf32>
    %37 = arith.addf %33, %36 : vector<64x64xf32>
    %c0_29 = arith.constant 0 : index
    %c0_30 = arith.constant 0 : index
    %38 = vector.load %arg5[%c0_29, %c0_30] : memref<1x64xf32, #tpu.memory_space<vmem>>, vector<1x64xf32>
    %39 = vector.broadcast %38 : vector<1x64xf32> to vector<64x64xf32>
    %40 = arith.addf %37, %39 : vector<64x64xf32>
    %cst_31 = arith.constant 0.000000e+00 : f32
    %41 = vector.broadcast %cst_31 : f32 to vector<64x64xf32>
    %42 = arith.maximumf %40, %41 : vector<64x64xf32>
    %43 = vector.shape_cast %42 : vector<64x64xf32> to vector<4x2x8x64xf32>
    %44 = vector.extract_strided_slice %43 {offsets = [0, 0, 0, 0], sizes = [4, 1, 8, 64], strides = [1, 1, 1, 1]} : vector<4x2x8x64xf32> to vector<4x1x8x64xf32>
    %45 = vector.shape_cast %44 : vector<4x1x8x64xf32> to vector<4x8x64xf32>
    %46 = vector.extract_strided_slice %43 {offsets = [0, 1, 0, 0], sizes = [4, 1, 8, 64], strides = [1, 1, 1, 1]} : vector<4x2x8x64xf32> to vector<4x1x8x64xf32>
    %47 = vector.shape_cast %46 : vector<4x1x8x64xf32> to vector<4x8x64xf32>
    %48 = arith.maximumf %45, %47 : vector<4x8x64xf32>
    %49 = vector.shape_cast %48 : vector<4x8x64xf32> to vector<32x64xf32>
    %50 = arith.truncf %49 : vector<32x64xf32> to vector<32x64xbf16>
    %c0_32 = arith.constant 0 : index
    %c0_33 = arith.constant 0 : index
    %51 = vector.load %arg6[%c0_32, %c0_33] : memref<64x256xbf16, #tpu.memory_space<vmem>>, vector<64x256xbf16>
    %cst_34 = arith.constant dense<0.000000e+00> : vector<32x256xf32>
    %52 = tpu.matmul %50, %51, %cst_34 {dimension_numbers = #tpu.dot_dimension_numbers<[1], [0], [0], [1], [0, 0, 1, 1], [], []>} : vector<32x64xbf16>, vector<64x256xbf16>, vector<32x256xf32> -> vector<32x256xf32>
    %c0_35 = arith.constant 0 : index
    %c0_36 = arith.constant 0 : index
    %53 = vector.load %arg8[%c0_35, %c0_36] : memref<1x256xf32, #tpu.memory_space<vmem>>, vector<1x256xf32>
    %54 = vector.broadcast %53 : vector<1x256xf32> to vector<32x256xf32>
    %55 = arith.addf %52, %54 : vector<32x256xf32>
    %56 = vector.shape_cast %55 : vector<32x256xf32> to vector<4x8x256xf32>
    %c0_37 = arith.constant 0 : index
    %c0_38 = arith.constant 0 : index
    %c0_39 = arith.constant 0 : index
    %57 = vector.load %arg13[%c0_37, %c0_38, %c0_39] : memref<4x8x256xf32, #tpu.memory_space<vmem>>, vector<4x8x256xf32>
    tpu.vector_store %arg13[%c0_37, %c0_38, %c0_39], %56 {strides = array<i32>} : memref<4x8x256xf32, #tpu.memory_space<vmem>>, vector<4x8x256xf32>,
    %c0_40 = arith.constant 0 : index
    %c0_41 = arith.constant 0 : index
    %58 = vector.load %arg7[%c0_40, %c0_41] : memref<64x256xbf16, #tpu.memory_space<vmem>>, vector<64x256xbf16>
    %cst_42 = arith.constant 0.000000e+00 : f32
    %59 = vector.broadcast %cst_42 : f32 to vector<8x64xf32>
    %cst_43 = arith.constant 0.000000e+00 : f32
    %60 = vector.broadcast %cst_43 : f32 to vector<8x64xf32>
    %c0_i32 = arith.constant 0 : i32
    %61 = arith.index_cast %c0_i32 : i32 to index
    %c0_44 = arith.constant 0 : index
    %c0_45 = arith.constant 0 : index
    %62 = vector.load %arg13[%61, %c0_44, %c0_45] : memref<4x8x256xf32, #tpu.memory_space<vmem>>, vector<1x8x256xf32>
    %63 = vector.shape_cast %62 : vector<1x8x256xf32> to vector<8x256xf32>
    %64 = arith.truncf %59 : vector<8x64xf32> to vector<8x64xbf16>
    %cst_46 = arith.constant dense<0.000000e+00> : vector<8x256xf32>
    %65 = tpu.matmul %64, %58, %cst_46 {dimension_numbers = #tpu.dot_dimension_numbers<[1], [0], [0], [1], [0, 0, 1, 1], [], []>} : vector<8x64xbf16>, vector<64x256xbf16>, vector<8x256xf32> -> vector<8x256xf32>
    %66 = arith.addf %63, %65 : vector<8x256xf32>
    %67 = vector.extract_strided_slice %66 {offsets = [0, 0], sizes = [8, 192], strides = [1, 1]} : vector<8x256xf32> to vector<8x192xf32>
    %68 = arith.negf %67 : vector<8x192xf32>
    %69 = math.exp %68 : vector<8x192xf32>
    %cst_47 = arith.constant 1.000000e+00 : f32
    %70 = vector.broadcast %cst_47 : f32 to vector<8x192xf32>
    %71 = arith.addf %70, %69 : vector<8x192xf32>
    %72 = arith.divf %70, %71 : vector<8x192xf32>
    %73 = vector.extract_strided_slice %66 {offsets = [0, 192], sizes = [8, 64], strides = [1, 1]} : vector<8x256xf32> to vector<8x64xf32>
    %74 = math.tanh %73 : vector<8x64xf32>
    %75 = vector.extract_strided_slice %72 {offsets = [0, 0], sizes = [8, 64], strides = [1, 1]} : vector<8x192xf32> to vector<8x64xf32>
    %76 = vector.extract_strided_slice %72 {offsets = [0, 64], sizes = [8, 64], strides = [1, 1]} : vector<8x192xf32> to vector<8x64xf32>
    %77 = vector.extract_strided_slice %72 {offsets = [0, 128], sizes = [8, 64], strides = [1, 1]} : vector<8x192xf32> to vector<8x64xf32>
    %78 = arith.mulf %76, %60 : vector<8x64xf32>
    %79 = arith.mulf %75, %74 : vector<8x64xf32>
    %80 = arith.addf %78, %79 : vector<8x64xf32>
    %81 = math.tanh %80 : vector<8x64xf32>
    %82 = arith.mulf %77, %81 : vector<8x64xf32>
    %c1_i32 = arith.constant 1 : i32
    %83 = arith.index_cast %c1_i32 : i32 to index
    %c0_48 = arith.constant 0 : index
    %c0_49 = arith.constant 0 : index
    %84 = vector.load %arg13[%83, %c0_48, %c0_49] : memref<4x8x256xf32, #tpu.memory_space<vmem>>, vector<1x8x256xf32>
    %85 = vector.shape_cast %84 : vector<1x8x256xf32> to vector<8x256xf32>
    %86 = arith.truncf %82 : vector<8x64xf32> to vector<8x64xbf16>
    %cst_50 = arith.constant dense<0.000000e+00> : vector<8x256xf32>
    %87 = tpu.matmul %86, %58, %cst_50 {dimension_numbers = #tpu.dot_dimension_numbers<[1], [0], [0], [1], [0, 0, 1, 1], [], []>} : vector<8x64xbf16>, vector<64x256xbf16>, vector<8x256xf32> -> vector<8x256xf32>
    %88 = arith.addf %85, %87 : vector<8x256xf32>
    %89 = vector.extract_strided_slice %88 {offsets = [0, 0], sizes = [8, 192], strides = [1, 1]} : vector<8x256xf32> to vector<8x192xf32>
    %90 = arith.negf %89 : vector<8x192xf32>
    %91 = math.exp %90 : vector<8x192xf32>
    %cst_51 = arith.constant 1.000000e+00 : f32
    %92 = vector.broadcast %cst_51 : f32 to vector<8x192xf32>
    %93 = arith.addf %92, %91 : vector<8x192xf32>
    %94 = arith.divf %92, %93 : vector<8x192xf32>
    %95 = vector.extract_strided_slice %88 {offsets = [0, 192], sizes = [8, 64], strides = [1, 1]} : vector<8x256xf32> to vector<8x64xf32>
    %96 = math.tanh %95 : vector<8x64xf32>
    %97 = vector.extract_strided_slice %94 {offsets = [0, 0], sizes = [8, 64], strides = [1, 1]} : vector<8x192xf32> to vector<8x64xf32>
    %98 = vector.extract_strided_slice %94 {offsets = [0, 64], sizes = [8, 64], strides = [1, 1]} : vector<8x192xf32> to vector<8x64xf32>
    %99 = vector.extract_strided_slice %94 {offsets = [0, 128], sizes = [8, 64], strides = [1, 1]} : vector<8x192xf32> to vector<8x64xf32>
    %100 = arith.mulf %98, %80 : vector<8x64xf32>
    %101 = arith.mulf %97, %96 : vector<8x64xf32>
    %102 = arith.addf %100, %101 : vector<8x64xf32>
    %103 = math.tanh %102 : vector<8x64xf32>
    %104 = arith.mulf %99, %103 : vector<8x64xf32>
    %c2_i32 = arith.constant 2 : i32
    %105 = arith.index_cast %c2_i32 : i32 to index
    %c0_52 = arith.constant 0 : index
    %c0_53 = arith.constant 0 : index
    %106 = vector.load %arg13[%105, %c0_52, %c0_53] : memref<4x8x256xf32, #tpu.memory_space<vmem>>, vector<1x8x256xf32>
    %107 = vector.shape_cast %106 : vector<1x8x256xf32> to vector<8x256xf32>
    %108 = arith.truncf %104 : vector<8x64xf32> to vector<8x64xbf16>
    %cst_54 = arith.constant dense<0.000000e+00> : vector<8x256xf32>
    %109 = tpu.matmul %108, %58, %cst_54 {dimension_numbers = #tpu.dot_dimension_numbers<[1], [0], [0], [1], [0, 0, 1, 1], [], []>} : vector<8x64xbf16>, vector<64x256xbf16>, vector<8x256xf32> -> vector<8x256xf32>
    %110 = arith.addf %107, %109 : vector<8x256xf32>
    %111 = vector.extract_strided_slice %110 {offsets = [0, 0], sizes = [8, 192], strides = [1, 1]} : vector<8x256xf32> to vector<8x192xf32>
    %112 = arith.negf %111 : vector<8x192xf32>
    %113 = math.exp %112 : vector<8x192xf32>
    %cst_55 = arith.constant 1.000000e+00 : f32
    %114 = vector.broadcast %cst_55 : f32 to vector<8x192xf32>
    %115 = arith.addf %114, %113 : vector<8x192xf32>
    %116 = arith.divf %114, %115 : vector<8x192xf32>
    %117 = vector.extract_strided_slice %110 {offsets = [0, 192], sizes = [8, 64], strides = [1, 1]} : vector<8x256xf32> to vector<8x64xf32>
    %118 = math.tanh %117 : vector<8x64xf32>
    %119 = vector.extract_strided_slice %116 {offsets = [0, 0], sizes = [8, 64], strides = [1, 1]} : vector<8x192xf32> to vector<8x64xf32>
    %120 = vector.extract_strided_slice %116 {offsets = [0, 64], sizes = [8, 64], strides = [1, 1]} : vector<8x192xf32> to vector<8x64xf32>
    %121 = vector.extract_strided_slice %116 {offsets = [0, 128], sizes = [8, 64], strides = [1, 1]} : vector<8x192xf32> to vector<8x64xf32>
    %122 = arith.mulf %120, %102 : vector<8x64xf32>
    %123 = arith.mulf %119, %118 : vector<8x64xf32>
    %124 = arith.addf %122, %123 : vector<8x64xf32>
    %125 = math.tanh %124 : vector<8x64xf32>
    %126 = arith.mulf %121, %125 : vector<8x64xf32>
    %c3_i32 = arith.constant 3 : i32
    %127 = arith.index_cast %c3_i32 : i32 to index
    %c0_56 = arith.constant 0 : index
    %c0_57 = arith.constant 0 : index
    %128 = vector.load %arg13[%127, %c0_56, %c0_57] : memref<4x8x256xf32, #tpu.memory_space<vmem>>, vector<1x8x256xf32>
    %129 = vector.shape_cast %128 : vector<1x8x256xf32> to vector<8x256xf32>
    %130 = arith.truncf %126 : vector<8x64xf32> to vector<8x64xbf16>
    %cst_58 = arith.constant dense<0.000000e+00> : vector<8x256xf32>
    %131 = tpu.matmul %130, %58, %cst_58 {dimension_numbers = #tpu.dot_dimension_numbers<[1], [0], [0], [1], [0, 0, 1, 1], [], []>} : vector<8x64xbf16>, vector<64x256xbf16>, vector<8x256xf32> -> vector<8x256xf32>
    %132 = arith.addf %129, %131 : vector<8x256xf32>
    %133 = vector.extract_strided_slice %132 {offsets = [0, 0], sizes = [8, 192], strides = [1, 1]} : vector<8x256xf32> to vector<8x192xf32>
    %134 = arith.negf %133 : vector<8x192xf32>
    %135 = math.exp %134 : vector<8x192xf32>
    %cst_59 = arith.constant 1.000000e+00 : f32
    %136 = vector.broadcast %cst_59 : f32 to vector<8x192xf32>
    %137 = arith.addf %136, %135 : vector<8x192xf32>
    %138 = arith.divf %136, %137 : vector<8x192xf32>
    %139 = vector.extract_strided_slice %132 {offsets = [0, 192], sizes = [8, 64], strides = [1, 1]} : vector<8x256xf32> to vector<8x64xf32>
    %140 = math.tanh %139 : vector<8x64xf32>
    %141 = vector.extract_strided_slice %138 {offsets = [0, 0], sizes = [8, 64], strides = [1, 1]} : vector<8x192xf32> to vector<8x64xf32>
    %142 = vector.extract_strided_slice %138 {offsets = [0, 64], sizes = [8, 64], strides = [1, 1]} : vector<8x192xf32> to vector<8x64xf32>
    %143 = vector.extract_strided_slice %138 {offsets = [0, 128], sizes = [8, 64], strides = [1, 1]} : vector<8x192xf32> to vector<8x64xf32>
    %144 = arith.mulf %142, %124 : vector<8x64xf32>
    %145 = arith.mulf %141, %140 : vector<8x64xf32>
    %146 = arith.addf %144, %145 : vector<8x64xf32>
    %147 = math.tanh %146 : vector<8x64xf32>
    %148 = arith.mulf %143, %147 : vector<8x64xf32>
    %c4_i32 = arith.constant 4 : i32
    %149 = arith.truncf %148 : vector<8x64xf32> to vector<8x64xbf16>
    %c0_60 = arith.constant 0 : index
    %c0_61 = arith.constant 0 : index
    %150 = vector.load %arg9[%c0_60, %c0_61] : memref<64x128xbf16, #tpu.memory_space<vmem>>, vector<64x128xbf16>
    %cst_62 = arith.constant dense<0.000000e+00> : vector<8x128xf32>
    %151 = tpu.matmul %149, %150, %cst_62 {dimension_numbers = #tpu.dot_dimension_numbers<[1], [0], [0], [1], [0, 0, 1, 1], [], []>} : vector<8x64xbf16>, vector<64x128xbf16>, vector<8x128xf32> -> vector<8x128xf32>
    %c0_63 = arith.constant 0 : index
    %c0_64 = arith.constant 0 : index
    %152 = vector.load %arg10[%c0_63, %c0_64] : memref<1x128xf32, #tpu.memory_space<vmem>>, vector<1x128xf32>
    %153 = vector.broadcast %152 : vector<1x128xf32> to vector<8x128xf32>
    %154 = arith.addf %151, %153 : vector<8x128xf32>
    %c0_65 = arith.constant 0 : index
    %c0_66 = arith.constant 0 : index
    %155 = vector.load %arg11[%c0_65, %c0_66] : memref<8x128xf32, #tpu.memory_space<vmem>>, vector<8x128xf32>
    tpu.vector_store %arg11[%c0_65, %c0_66], %154 {strides = array<i32>} : memref<8x128xf32, #tpu.memory_space<vmem>>, vector<8x128xf32>,
    return
  }
  func.func @transform_0(%arg0: i32) -> (i32, i32, i32) {
    %c0_i32 = arith.constant 0 : i32
    %c0_i32_0 = arith.constant 0 : i32
    %c0_i32_1 = arith.constant 0 : i32
    return %c0_i32, %arg0, %c0_i32_0 : i32, i32, i32
  }
  func.func @transform_1(%arg0: i32) -> (i32, i32) {
    %c0_i32 = arith.constant 0 : i32
    %c0_i32_0 = arith.constant 0 : i32
    %c0_i32_1 = arith.constant 0 : i32
    return %c0_i32, %c0_i32_0 : i32, i32
  }
  func.func @transform_2(%arg0: i32) -> (i32, i32) {
    %c0_i32 = arith.constant 0 : i32
    %c0_i32_0 = arith.constant 0 : i32
    %c0_i32_1 = arith.constant 0 : i32
    return %c0_i32, %c0_i32_0 : i32, i32
  }
  func.func @transform_3(%arg0: i32) -> (i32, i32) {
    %c0_i32 = arith.constant 0 : i32
    %c0_i32_0 = arith.constant 0 : i32
    %c0_i32_1 = arith.constant 0 : i32
    return %c0_i32, %c0_i32_0 : i32, i32
  }
  func.func @transform_4(%arg0: i32) -> (i32, i32) {
    %c0_i32 = arith.constant 0 : i32
    %c0_i32_0 = arith.constant 0 : i32
    %c0_i32_1 = arith.constant 0 : i32
    return %c0_i32, %c0_i32_0 : i32, i32
  }
  func.func @transform_5(%arg0: i32) -> (i32, i32) {
    %c0_i32 = arith.constant 0 : i32
    %c0_i32_0 = arith.constant 0 : i32
    %c0_i32_1 = arith.constant 0 : i32
    return %c0_i32, %c0_i32_0 : i32, i32
  }
  func.func @transform_6(%arg0: i32) -> (i32, i32) {
    %c0_i32 = arith.constant 0 : i32
    %c0_i32_0 = arith.constant 0 : i32
    %c0_i32_1 = arith.constant 0 : i32
    return %c0_i32, %c0_i32_0 : i32, i32
  }
  func.func @transform_7(%arg0: i32) -> (i32, i32) {
    %c0_i32 = arith.constant 0 : i32
    %c0_i32_0 = arith.constant 0 : i32
    %c0_i32_1 = arith.constant 0 : i32
    return %c0_i32, %c0_i32_0 : i32, i32
  }
  func.func @transform_8(%arg0: i32) -> (i32, i32) {
    %c0_i32 = arith.constant 0 : i32
    %c0_i32_0 = arith.constant 0 : i32
    %c0_i32_1 = arith.constant 0 : i32
    return %c0_i32, %c0_i32_0 : i32, i32
  }
  func.func @transform_9(%arg0: i32) -> (i32, i32) {
    %c0_i32 = arith.constant 0 : i32
    %c0_i32_0 = arith.constant 0 : i32
    %c0_i32_1 = arith.constant 0 : i32
    return %c0_i32, %c0_i32_0 : i32, i32
  }
  func.func @transform_10(%arg0: i32) -> (i32, i32) {
    %c0_i32 = arith.constant 0 : i32
    %c0_i32_0 = arith.constant 0 : i32
    return %arg0, %c0_i32 : i32, i32
  }
}

</mosaic_0001>

<llo_original>
// kernel: _ppg_forward_jit.1
$region0: #{_ppg_forward_jit.1}
  #allocation0 [shape = 'u32[]', space=smem, size = 0x4, offset = 0x4, fixed_abs, tag = 'smem constant byte address 0x4 - core index']
  #allocation1 [shape = 'u32[144,128]{1,0:T(1,128)}', space=vmem, size = 0x12000, scoped, tag = 'internal scratch']
  #allocation2 [shape = 'bf16[8,8,320]{2,1,0:T(8,128)(2,1)}', space=vmem, size = 0xc000, scoped, tag = 'scratch operand']
  #allocation3 [shape = 'f32[4,8,256]{2,1,0:T(8,128)}', space=vmem, size = 0x8000, scoped, tag = 'scratch operand']
  %s0 = inlined_call_operand.vmem [shape: bf16[16,8,10], index: 0, kind: input, shape index: {}]
  %s1 = inlined_call_operand.vmem [shape: bf16[10,64], index: 1, kind: input, shape index: {}]
  %s2 = inlined_call_operand.vmem [shape: f32[1,64], index: 2, kind: input, shape index: {}]
  %s3 = inlined_call_operand.vmem [shape: bf16[320,64], index: 3, kind: input, shape index: {}]
  %s4 = inlined_call_operand.vmem [shape: f32[1,64], index: 4, kind: input, shape index: {}]
  %s5 = inlined_call_operand.vmem [shape: bf16[64,256], index: 5, kind: input, shape index: {}]
  %s6 = inlined_call_operand.vmem [shape: bf16[64,256], index: 6, kind: input, shape index: {}]
  %s7 = inlined_call_operand.vmem [shape: f32[1,256], index: 7, kind: input, shape index: {}]
  %s8 = inlined_call_operand.vmem [shape: bf16[64,128], index: 8, kind: input, shape index: {}]
  %s9 = inlined_call_operand.vmem [shape: f32[1,128], index: 9, kind: input, shape index: {}]
  %s10 = inlined_call_operand.vmem [shape: f32[8,128], index: 10, kind: output, shape index: {}]
  %s11 = sld [smem:[#allocation0]]
  $region50: #{_ppg_forward_jit.1} parent=0
    _
  %s13 = ssub.s32 1, %s11
  %s14 = scalar_select 0, %s13, %s11
  // Predicated region
  $region2: #{_ppg_forward_jit.1} parent=0 // pred_check
    _
  $region3: #{_ppg_forward_jit.1} parent=0 // pred_check_branch
    %16 = sbr.rel (0) target = $region5
  $region4: #{_ppg_forward_jit.1} parent=0 // pred_region
    _
  $region5: #{_ppg_forward_jit.1} parent=0 // pred_fallthru
    _
  // Predicated region
  $region6: #{_ppg_forward_jit.1} parent=0 // pred_check
    _
  $region7: #{_ppg_forward_jit.1} parent=0 // pred_check_branch
    %18 = sbr.rel (0) target = $region9
  $region8: #{_ppg_forward_jit.1} parent=0 // pred_region
    _
  $region9: #{_ppg_forward_jit.1} parent=0 // pred_fallthru
    _
  // Predicated region
  $region10: #{_ppg_forward_jit.1} parent=0 // pred_check
    _
  $region11: #{_ppg_forward_jit.1} parent=0 // pred_check_branch
    %20 = sbr.rel (0) target = $region13
  $region12: #{_ppg_forward_jit.1} parent=0 // pred_region
    _
  $region13: #{_ppg_forward_jit.1} parent=0 // pred_fallthru
    _
  // Predicated region
  $region14: #{_ppg_forward_jit.1} parent=0 // pred_check
    _
  $region15: #{_ppg_forward_jit.1} parent=0 // pred_check_branch
    %22 = sbr.rel (0) target = $region17
  $region16: #{_ppg_forward_jit.1} parent=0 // pred_region
    _
  $region17: #{_ppg_forward_jit.1} parent=0 // pred_fallthru
    _
  // Predicated region
  $region18: #{_ppg_forward_jit.1} parent=0 // pred_check
    _
  $region19: #{_ppg_forward_jit.1} parent=0 // pred_check_branch
    %24 = sbr.rel (0) target = $region21
  $region20: #{_ppg_forward_jit.1} parent=0 // pred_region
    _
  $region21: #{_ppg_forward_jit.1} parent=0 // pred_fallthru
    _
  // Predicated region
  $region22: #{_ppg_forward_jit.1} parent=0 // pred_check
    _
  $region23: #{_ppg_forward_jit.1} parent=0 // pred_check_branch
    %26 = sbr.rel (0) target = $region25
  $region24: #{_ppg_forward_jit.1} parent=0 // pred_region
    _
  $region25: #{_ppg_forward_jit.1} parent=0 // pred_fallthru
    _
  // Predicated region
  $region26: #{_ppg_forward_jit.1} parent=0 // pred_check
    _
  $region27: #{_ppg_forward_jit.1} parent=0 // pred_check_branch
    %28 = sbr.rel (0) target = $region29
  $region28: #{_ppg_forward_jit.1} parent=0 // pred_region
    _
  $region29: #{_ppg_forward_jit.1} parent=0 // pred_fallthru
    _
  // Predicated region
  $region30: #{_ppg_forward_jit.1} parent=0 // pred_check
    _
  $region31: #{_ppg_forward_jit.1} parent=0 // pred_check_branch
    %30 = sbr.rel (0) target = $region33
  $region32: #{_ppg_forward_jit.1} parent=0 // pred_region
    _
  $region33: #{_ppg_forward_jit.1} parent=0 // pred_fallthru
    _
  // Predicated region
  $region34: #{_ppg_forward_jit.1} parent=0 // pred_check
    _
  $region35: #{_ppg_forward_jit.1} parent=0 // pred_check_branch
    %32 = sbr.rel (0) target = $region37
  $region36: #{_ppg_forward_jit.1} parent=0 // pred_region
    _
  $region37: #{_ppg_forward_jit.1} parent=0 // pred_fallthru
    _
  // Predicated region
  $region38: #{_ppg_forward_jit.1} parent=0 // pred_check
    _
  $region39: #{_ppg_forward_jit.1} parent=0 // pred_check_branch
    %34 = sbr.rel (0) target = $region41
  $region40: #{_ppg_forward_jit.1} parent=0 // pred_region
    _
  $region41: #{_ppg_forward_jit.1} parent=0 // pred_fallthru
    _
  %v36 = vld [vmem:[%s0] sm:$0xf]
  %v37 = vld [vmem:[%s0 + $0x4] sm:$0xf]
  %v38 = vld [vmem:[%s0 + $0x8] sm:$0xf]
  %v39 = vld [vmem:[%s0 + $0xc] sm:$0xf]
  %v40 = vld [vmem:[%s0 + $0x10] sm:$0xf]
  %v41 = vld [vmem:[%s0 + $0x14] sm:$0xf]
  %v42 = vld [vmem:[%s0 + $0x18] sm:$0xf]
  %v43 = vld [vmem:[%s0 + $0x1c] sm:$0xf]
  %v44 = vld [vmem:[%s0 + $0x20] sm:$0xf]
  %v45 = vld [vmem:[%s0 + $0x24] sm:$0xf]
  %v46 = vld [vmem:[%s0 + $0x28] sm:$0xf]
  %v47 = vld [vmem:[%s0 + $0x2c] sm:$0xf]
  %v48 = vld [vmem:[%s0 + $0x30] sm:$0xf]
  %v49 = vld [vmem:[%s0 + $0x34] sm:$0xf]
  %v50 = vld [vmem:[%s0 + $0x38] sm:$0xf]
  %v51 = vld [vmem:[%s0 + $0x3c] sm:$0xf]
  %v52 = vld [vmem:[%s1] sm:$0xf]
  %v53 = vld [vmem:[%s1 + $0x4] sm:$0x1]
  %v54 = vld [vmem:[%s2] sm:$0x1]
  %v56 = vlaneseq
  %v57 = vshrl.u32 %v56, 7
  %v58 = vsub.s32 0, %v57
  %v59 = vrot.slane %v54, %v58
  %v77 = vunpack.c.l.b16 %v36
  %v78 = vunpack.c.l.b16 %v37
  %v79 = vunpack.c.l.b16 %v38
  %v80 = vunpack.c.l.b16 %v39
  %v81 = vunpack.c.l.b16 %v40
  %v82 = vunpack.c.l.b16 %v41
  %v83 = vunpack.c.l.b16 %v42
  %v84 = vunpack.c.l.b16 %v43
  %v85 = vunpack.c.l.b16 %v44
  %v86 = vunpack.c.l.b16 %v45
  %v87 = vunpack.c.l.b16 %v46
  %v88 = vunpack.c.l.b16 %v47
  %v89 = vunpack.c.l.b16 %v48
  %v90 = vunpack.c.l.b16 %v49
  %v91 = vunpack.c.l.b16 %v50
  %v92 = vunpack.c.l.b16 %v51
  %v93 = vpack.c.b16 %v78, %v77
  %v94 = vpack.c.b16 %v80, %v79
  %v95 = vpack.c.b16 %v82, %v81
  %v96 = vpack.c.b16 %v84, %v83
  %v97 = vpack.c.b16 %v86, %v85
  %v98 = vpack.c.b16 %v88, %v87
  %v99 = vpack.c.b16 %v90, %v89
  %v100 = vpack.c.b16 %v92, %v91
  %v103 = vunpack.c.l.b16 %v52
  %v104 = vunpack.c.l.b16 %v53
  %v105 = vpack.c.b16 %v104, %v103
  %vm106 = vcmask 80896
  %v108 = vsel %vm106, %v93, 0
  %v111 = vsel %vm106, %v94, 0
  %v114 = vsel %vm106, %v95, 0
  %v117 = vsel %vm106, %v96, 0
  %v120 = vsel %vm106, %v97, 0
  %v123 = vsel %vm106, %v98, 0
  %v126 = vsel %vm106, %v99, 0
  %v129 = vsel %vm106, %v100, 0
  %vm131 = vcmask 1044480
  %v133 = vsel %vm131, %v105, 0
  %135 = vmatprep.subr.bf16.mxu0 0
  %136 = vmatpush1.bf16.msra.mxu0 %v133
  %137 = vmatprep.subr.bf16.mxu0 0
  %138 = vmatpush1.bf16.msra.mxu0 0
  %139 = vmatprep.subr.bf16.mxu0 0
  %140 = vmatpush1.bf16.msra.mxu0 0
  %141 = vmatprep.subr.bf16.mxu0 0
  %142 = vmatpush1.bf16.msra.mxu0 0
  %143 = vmatprep.subr.bf16.mxu0 0
  %144 = vmatpush1.bf16.msra.mxu0 0
  %145 = vmatprep.subr.bf16.mxu0 0
  %146 = vmatpush1.bf16.msra.mxu0 0
  %147 = vmatprep.subr.bf16.mxu0 0
  %148 = vmatpush1.bf16.msra.mxu0 0
  %149 = vmatprep.subr.bf16.mxu0 0
  %150 = vmatpush1.bf16.msra.mxu0 0
  %151 = vmatprep.subr.bf16.mxu0 0
  %152 = vmatpush1.bf16.msra.mxu0 0
  %153 = vmatprep.subr.bf16.mxu0 0
  %154 = vmatpush1.bf16.msra.mxu0 0
  %155 = vmatprep.subr.bf16.mxu0 0
  %156 = vmatpush1.bf16.msra.mxu0 0
  %157 = vmatprep.subr.bf16.mxu0 0
  %158 = vmatpush1.bf16.msra.mxu0 0
  %159 = vmatprep.subr.bf16.mxu0 0
  %160 = vmatpush1.bf16.msra.mxu0 0
  %161 = vmatprep.subr.bf16.mxu0 0
  %162 = vmatpush1.bf16.msra.mxu0 0
  %163 = vmatprep.subr.bf16.mxu0 0
  %164 = vmatpush1.bf16.msra.mxu0 0
  %165 = vmatprep.subr.bf16.mxu0 0
  %166 = vmatpush1.bf16.msra.mxu0 0
  %167 = vmatprep.mubr.bf16.mxu0 0
  %168 = vmatmul.mubr.bf16.gmra.mrb[0].mxu0 %v108
  %v169 = vpop.f32.mrb[0].mxu0
  %v170 = vadd.f32 %v59, %v169
  %v171 = vpop.f32.mrb[0].mxu0
  %v172 = vpop.f32.mrb[0].mxu0
  %v173 = vadd.f32 %v59, %v172
  %v174 = vpop.f32.mrb[0].mxu0
  %175 = vmatprep.mubr.bf16.mxu0 0
  %176 = vmatmul.mubr.bf16.gmra.mrb[0].mxu0 %v111
  %v177 = vpop.f32.mrb[0].mxu0
  %v178 = vadd.f32 %v59, %v177
  %v179 = vpop.f32.mrb[0].mxu0
  %v180 = vpop.f32.mrb[0].mxu0
  %v181 = vadd.f32 %v59, %v180
  %v182 = vpop.f32.mrb[0].mxu0
  %183 = vmatprep.mubr.bf16.mxu0 0
  %184 = vmatmul.mubr.bf16.gmra.mrb[0].mxu0 %v114
  %v185 = vpop.f32.mrb[0].mxu0
  %v186 = vadd.f32 %v59, %v185
  %v187 = vpop.f32.mrb[0].mxu0
  %v188 = vpop.f32.mrb[0].mxu0
  %v189 = vadd.f32 %v59, %v188
  %v190 = vpop.f32.mrb[0].mxu0
  %191 = vmatprep.mubr.bf16.mxu0 0
  %192 = vmatmul.mubr.bf16.gmra.mrb[0].mxu0 %v117
  %v193 = vpop.f32.mrb[0].mxu0
  %v194 = vadd.f32 %v59, %v193
  %v195 = vpop.f32.mrb[0].mxu0
  %v196 = vpop.f32.mrb[0].mxu0
  %v197 = vadd.f32 %v59, %v196
  %v198 = vpop.f32.mrb[0].mxu0
  %199 = vmatprep.mubr.bf16.mxu0 0
  %200 = vmatmul.mubr.bf16.gmra.mrb[0].mxu0 %v120
  %v201 = vpop.f32.mrb[0].mxu0
  %v202 = vadd.f32 %v59, %v201
  %v203 = vpop.f32.mrb[0].mxu0
  %v204 = vpop.f32.mrb[0].mxu0
  %v205 = vadd.f32 %v59, %v204
  %v206 = vpop.f32.mrb[0].mxu0
  %207 = vmatprep.mubr.bf16.mxu0 0
  %208 = vmatmul.mubr.bf16.gmra.mrb[0].mxu0 %v123
  %v209 = vpop.f32.mrb[0].mxu0
  %v210 = vadd.f32 %v59, %v209
  %v211 = vpop.f32.mrb[0].mxu0
  %v212 = vpop.f32.mrb[0].mxu0
  %v213 = vadd.f32 %v59, %v212
  %v214 = vpop.f32.mrb[0].mxu0
  %215 = vmatprep.mubr.bf16.mxu0 0
  %216 = vmatmul.mubr.bf16.gmra.mrb[0].mxu0 %v126
  %v217 = vpop.f32.mrb[0].mxu0
  %v218 = vadd.f32 %v59, %v217
  %v219 = vpop.f32.mrb[0].mxu0
  %v220 = vpop.f32.mrb[0].mxu0
  %v221 = vadd.f32 %v59, %v220
  %v222 = vpop.f32.mrb[0].mxu0
  %223 = vmatprep.mubr.bf16.mxu0 0
  %224 = vmatmul.mubr.bf16.gmra.mrb[0].mxu0 %v129
  %v225 = vpop.f32.mrb[0].mxu0
  %v226 = vadd.f32 %v59, %v225
  %v227 = vpop.f32.mrb[0].mxu0
  %v228 = vpop.f32.mrb[0].mxu0
  %v229 = vadd.f32 %v59, %v228
  %v230 = vpop.f32.mrb[0].mxu0
  %231 = vdwg.mxu0
  %v232 = vmax.f32 %v170, 0.0
  %v233 = vmax.f32 %v173, 0.0
  %v234 = vmax.f32 %v178, 0.0
  %v235 = vmax.f32 %v181, 0.0
  %v236 = vmax.f32 %v186, 0.0
  %v237 = vmax.f32 %v189, 0.0
  %v238 = vmax.f32 %v194, 0.0
  %v239 = vmax.f32 %v197, 0.0
  %v240 = vmax.f32 %v202, 0.0
  %v241 = vmax.f32 %v205, 0.0
  %v242 = vmax.f32 %v210, 0.0
  %v243 = vmax.f32 %v213, 0.0
  %v244 = vmax.f32 %v218, 0.0
  %v245 = vmax.f32 %v221, 0.0
  %v246 = vmax.f32 %v226, 0.0
  %v247 = vmax.f32 %v229, 0.0
  %v248 = vmax.f32 %v232, %v233
  %v249 = vmax.f32 %v234, %v235
  %v250 = vmax.f32 %v236, %v237
  %v251 = vmax.f32 %v238, %v239
  %v252 = vmax.f32 %v240, %v241
  %v253 = vmax.f32 %v242, %v243
  %v254 = vmax.f32 %v244, %v245
  %v255 = vmax.f32 %v246, %v247
  %256 = vst [vmem:[#allocation2] sm:$0xff] 0
  %vm257 = vcmask 519168
  %258 = vst.msk [vmem:[#allocation2 + $0x8] sm:$0xf] %vm257, 0
  %259 = vst [vmem:[#allocation2 + $0xc] sm:$0xff] 0
  %260 = vst.msk [vmem:[#allocation2 + $0x14] sm:$0xf] %vm257, 0
  %s261 = scalar_lea.vmem [#allocation2], 72
  %262 = vst [vmem:[%s261] sm:$0xff] 0
  %263 = vst.msk [vmem:[%s261 + $0x8] sm:$0xf] %vm257, 0
  %264 = vst [vmem:[%s261 + $0xc] sm:$0xff] 0
  %265 = vst.msk [vmem:[%s261 + $0x14] sm:$0xf] %vm257, 0
  %v266 = vpack.c.bf16 %v248, %v248
  %v267 = vpack.c.bf16 %v249, %v249
  %v268 = vpack.c.bf16 %v250, %v250
  %v269 = vpack.c.bf16 %v251, %v251
  %v270 = vpack.c.bf16 %v252, %v252
  %v271 = vpack.c.bf16 %v253, %v253
  %v272 = vpack.c.bf16 %v254, %v254
  %v273 = vpack.c.bf16 %v255, %v255
  %s274 = scalar_lea.vmem [#allocation2], 24
  %275 = vst.msk [vmem:[%s274] sm:$0xf] %vm257, %v266
  %276 = vst.msk [vmem:[%s274 + $0xc] sm:$0xf] %vm257, %v267
  %277 = vst.msk [vmem:[%s274 + $0x18] sm:$0xf] %vm257, %v268
  %278 = vst.msk [vmem:[%s274 + $0x24] sm:$0xf] %vm257, %v269
  %279 = vst.msk [vmem:[%s274 + $0x30] sm:$0xf] %vm257, %v270
  %280 = vst.msk [vmem:[%s274 + $0x3c] sm:$0xf] %vm257, %v271
  %v288 = vunpack.c.l.b16 %v266
  %v289 = vunpack.c.l.b16 %v267
  %v290 = vunpack.c.l.b16 %v268
  %v291 = vunpack.c.l.b16 %v269
  %v292 = vunpack.c.l.b16 %v270
  %v293 = vunpack.c.l.b16 %v271
  %v294 = vunpack.c.l.b16 %v272
  %v295 = vpack.c.b16 %v288, %v288
  %v296 = vpack.c.b16 %v289, %v289
  %v297 = vpack.c.b16 %v290, %v290
  %v298 = vpack.c.b16 %v291, %v291
  %v299 = vpack.c.b16 %v292, %v292
  %v300 = vpack.c.b16 %v293, %v293
  %v301 = vpack.c.b16 %v294, %v294
  %302 = vrot.lane.b32.xlu0 %v295, 64
  %v303 = vpop.permute.xlu0 %302
  %304 = vrot.lane.b32.xlu0 %v296, 64
  %v305 = vpop.permute.xlu0 %304
  %306 = vrot.lane.b32.xlu0 %v297, 64
  %v307 = vpop.permute.xlu0 %306
  %308 = vrot.lane.b32.xlu0 %v298, 64
  %v309 = vpop.permute.xlu0 %308
  %310 = vrot.lane.b32.xlu0 %v299, 64
  %v311 = vpop.permute.xlu0 %310
  %312 = vrot.lane.b32.xlu0 %v300, 64
  %v313 = vpop.permute.xlu0 %312
  %314 = vrot.lane.b32.xlu0 %v301, 64
  %v315 = vpop.permute.xlu0 %314
  %s323 = scalar_lea.vmem [#allocation2], 12
  %vm324 = vcmask 1043968
  %325 = vst.msk [vmem:[%s323] sm:$0xf] %vm324, %v303
  %326 = vst.msk [vmem:[%s323 + $0xc] sm:$0xf] %vm324, %v305
  %327 = vst.msk [vmem:[%s323 + $0x18] sm:$0xf] %vm324, %v307
  %328 = vst.msk [vmem:[%s323 + $0x24] sm:$0xf] %vm324, %v309
  %329 = vst.msk [vmem:[%s323 + $0x30] sm:$0xf] %vm324, %v311
  %330 = vst.msk [vmem:[%s323 + $0x3c] sm:$0xf] %vm324, %v313
  %331 = vst.msk [vmem:[%s323 + $0x48] sm:$0xf] %vm324, %v315
  %332 = vst.msk [vmem:[#allocation2 + $0x4] sm:$0xf] %vm257, %v266
  %333 = vst.msk [vmem:[#allocation2 + $0x10] sm:$0xf] %vm257, %v267
  %334 = vst.msk [vmem:[#allocation2 + $0x1c] sm:$0xf] %vm257, %v268
  %335 = vst.msk [vmem:[#allocation2 + $0x28] sm:$0xf] %vm257, %v269
  %336 = vst.msk [vmem:[#allocation2 + $0x34] sm:$0xf] %vm257, %v270
  %337 = vst.msk [vmem:[#allocation2 + $0x40] sm:$0xf] %vm257, %v271
  %338 = vst.msk [vmem:[#allocation2 + $0x4c] sm:$0xf] %vm257, %v272
  %339 = vst.msk [vmem:[#allocation2 + $0x58] sm:$0xf] %vm257, %v273
  %v341 = vunpack.c.l.b16 %v273
  %v342 = vpack.c.b16 %v341, %v341
  %343 = vrot.lane.b32.xlu0 %v342, 64
  %v344 = vpop.permute.xlu0 %343
  %346 = vst.msk [vmem:[#allocation2 + $0x4] sm:$0xf] %vm324, %v305
  %347 = vst.msk [vmem:[#allocation2 + $0x10] sm:$0xf] %vm324, %v307
  %348 = vst.msk [vmem:[#allocation2 + $0x1c] sm:$0xf] %vm324, %v309
  %349 = vst.msk [vmem:[#allocation2 + $0x28] sm:$0xf] %vm324, %v311
  %350 = vst.msk [vmem:[#allocation2 + $0x34] sm:$0xf] %vm324, %v313
  %351 = vst.msk [vmem:[#allocation2 + $0x40] sm:$0xf] %vm324, %v315
  %352 = vst.msk [vmem:[#allocation2 + $0x4c] sm:$0xf] %vm324, %v344
  %353 = vst.msk [vmem:[#allocation2 + $0x8] sm:$0xf] %vm257, %v268
  %354 = vst.msk [vmem:[#allocation2 + $0x14] sm:$0xf] %vm257, %v269
  %355 = vst.msk [vmem:[#allocation2 + $0x20] sm:$0xf] %vm257, %v270
  %356 = vst.msk [vmem:[#allocation2 + $0x2c] sm:$0xf] %vm257, %v271
  %357 = vst.msk [vmem:[#allocation2 + $0x38] sm:$0xf] %vm257, %v272
  %358 = vst.msk [vmem:[#allocation2 + $0x44] sm:$0xf] %vm257, %v273
  %v359 = vld [vmem:[#allocation2] sm:$0xff]
  %v360 = vld [vmem:[#allocation2 + $0x8] sm:$0xf]
  %v361 = vld [vmem:[#allocation2 + $0xc] sm:$0xff]
  %v362 = vld [vmem:[#allocation2 + $0x14] sm:$0xf]
  %v363 = vld [vmem:[#allocation2 + $0x18] sm:$0xff]
  %v364 = vld [vmem:[#allocation2 + $0x20] sm:$0xf]
  %v365 = vld [vmem:[#allocation2 + $0x24] sm:$0xff]
  %v366 = vld [vmem:[#allocation2 + $0x2c] sm:$0xf]
  %v367 = vld [vmem:[#allocation2 + $0x30] sm:$0xff]
  %v368 = vld [vmem:[#allocation2 + $0x38] sm:$0xf]
  %v369 = vld [vmem:[#allocation2 + $0x3c] sm:$0xff]
  %v370 = vld [vmem:[#allocation2 + $0x44] sm:$0xf]
  %v371 = vld [vmem:[#allocation2 + $0x48] sm:$0xff]
  %v372 = vld [vmem:[#allocation2 + $0x50] sm:$0xf]
  %v373 = vld [vmem:[#allocation2 + $0x54] sm:$0xff]
  %v374 = vld [vmem:[#allocation2 + $0x5c] sm:$0xf]
  %v375 = vld [vmem:[%s3] sm:$0xf]
  %v376 = vld [vmem:[%s3 + $0x4] sm:$0xf]
  %v377 = vld [vmem:[%s3 + $0x8] sm:$0xf]
  %v378 = vld [vmem:[%s3 + $0xc] sm:$0xf]
  %v379 = vld [vmem:[%s3 + $0x10] sm:$0xf]
  %v380 = vld [vmem:[%s3 + $0x14] sm:$0xf]
  %v381 = vld [vmem:[%s3 + $0x18] sm:$0xf]
  %v382 = vld [vmem:[%s3 + $0x1c] sm:$0xf]
  %v383 = vld [vmem:[%s3 + $0x20] sm:$0xf]
  %v384 = vld [vmem:[%s3 + $0x24] sm:$0xf]
  %v385 = vld [vmem:[%s3 + $0x28] sm:$0xf]
  %v386 = vld [vmem:[%s3 + $0x2c] sm:$0xf]
  %v387 = vld [vmem:[%s3 + $0x30] sm:$0xf]
  %v388 = vld [vmem:[%s3 + $0x34] sm:$0xf]
  %v389 = vld [vmem:[%s3 + $0x38] sm:$0xf]
  %v390 = vld [vmem:[%s3 + $0x3c] sm:$0xf]
  %v391 = vld [vmem:[%s3 + $0x40] sm:$0xf]
  %v392 = vld [vmem:[%s3 + $0x44] sm:$0xf]
  %v393 = vld [vmem:[%s3 + $0x48] sm:$0xf]
  %v394 = vld [vmem:[%s3 + $0x4c] sm:$0xf]
  %v395 = vld [vmem:[%s3 + $0x50] sm:$0xf]
  %v396 = vld [vmem:[%s3 + $0x54] sm:$0xf]
  %v397 = vld [vmem:[%s3 + $0x58] sm:$0xf]
  %v398 = vld [vmem:[%s3 + $0x5c] sm:$0xf]
  %v399 = vld [vmem:[%s3 + $0x60] sm:$0xf]
  %v400 = vld [vmem:[%s3 + $0x64] sm:$0xf]
  %v401 = vld [vmem:[%s3 + $0x68] sm:$0xf]
  %v402 = vld [vmem:[%s3 + $0x6c] sm:$0xf]
  %v403 = vld [vmem:[%s3 + $0x70] sm:$0xf]
  %v404 = vld [vmem:[%s3 + $0x74] sm:$0xf]
  %v405 = vld [vmem:[%s3 + $0x78] sm:$0xf]
  %v406 = vld [vmem:[%s3 + $0x7c] sm:$0xf]
  %v407 = vld [vmem:[%s3 + $0x80] sm:$0xf]
  %v408 = vld [vmem:[%s3 + $0x84] sm:$0xf]
  %v409 = vld [vmem:[%s3 + $0x88] sm:$0xf]
  %v410 = vld [vmem:[%s3 + $0x8c] sm:$0xf]
  %v411 = vld [vmem:[%s3 + $0x90] sm:$0xf]
  %v412 = vld [vmem:[%s3 + $0x94] sm:$0xf]
  %v413 = vld [vmem:[%s3 + $0x98] sm:$0xf]
  %v414 = vld [vmem:[%s3 + $0x9c] sm:$0xf]
  %v423 = vunpack.c.l.b16 %v360
  %v424 = vunpack.c.l.b16 %v362
  %v425 = vunpack.c.l.b16 %v364
  %v426 = vunpack.c.l.b16 %v366
  %v427 = vunpack.c.l.b16 %v368
  %v428 = vunpack.c.l.b16 %v370
  %v429 = vunpack.c.l.b16 %v372
  %v430 = vunpack.c.l.b16 %v374
  %v431 = vpack.c.b16 %v424, %v423
  %v432 = vpack.c.b16 %v426, %v425
  %v433 = vpack.c.b16 %v428, %v427
  %v434 = vpack.c.b16 %v430, %v429
  %v443 = vunpack.c.l.b16 %v407
  %v444 = vunpack.c.l.b16 %v408
  %v445 = vunpack.c.l.b16 %v409
  %v446 = vunpack.c.l.b16 %v410
  %v447 = vunpack.c.l.b16 %v411
  %v448 = vunpack.c.l.b16 %v412
  %v449 = vunpack.c.l.b16 %v413
  %v450 = vunpack.c.l.b16 %v414
  %v451 = vpack.c.b16 %v444, %v443
  %v452 = vpack.c.b16 %v446, %v445
  %v453 = vpack.c.b16 %v448, %v447
  %v454 = vpack.c.b16 %v450, %v449
  %vm459 = vcmask 523264
  %v461 = vsel %vm459, %v431, 0
  %v464 = vsel %vm459, %v432, 0
  %v467 = vsel %vm459, %v433, 0
  %v470 = vsel %vm459, %v434, 0
  %472 = vmatprep.subr.bf16.mxu0 0
  %473 = vmatpush1.bf16.msra.mxu0 %v451
  %474 = vmatprep.subr.bf16.mxu0 0
  %475 = vmatpush1.bf16.msra.mxu0 %v452
  %476 = vmatprep.subr.bf16.mxu0 0
  %477 = vmatpush1.bf16.msra.mxu0 %v453
  %478 = vmatprep.subr.bf16.mxu0 0
  %479 = vmatpush1.bf16.msra.mxu0 %v454
  %480 = vmatprep.subr.bf16.mxu0 0
  %481 = vmatpush1.bf16.msra.mxu0 0
  %482 = vmatprep.subr.bf16.mxu0 0
  %483 = vmatpush1.bf16.msra.mxu0 0
  %484 = vmatprep.subr.bf16.mxu0 0
  %485 = vmatpush1.bf16.msra.mxu0 0
  %486 = vmatprep.subr.bf16.mxu0 0
  %487 = vmatpush1.bf16.msra.mxu0 0
  %488 = vmatprep.subr.bf16.mxu0 0
  %489 = vmatpush1.bf16.msra.mxu0 0
  %490 = vmatprep.subr.bf16.mxu0 0
  %491 = vmatpush1.bf16.msra.mxu0 0
  %492 = vmatprep.subr.bf16.mxu0 0
  %493 = vmatpush1.bf16.msra.mxu0 0
  %494 = vmatprep.subr.bf16.mxu0 0
  %495 = vmatpush1.bf16.msra.mxu0 0
  %496 = vmatprep.subr.bf16.mxu0 0
  %497 = vmatpush1.bf16.msra.mxu0 0
  %498 = vmatprep.subr.bf16.mxu0 0
  %499 = vmatpush1.bf16.msra.mxu0 0
  %500 = vmatprep.subr.bf16.mxu0 0
  %501 = vmatpush1.bf16.msra.mxu0 0
  %502 = vmatprep.subr.bf16.mxu0 0
  %503 = vmatpush1.bf16.msra.mxu0 0
  %504 = vmatprep.mubr.bf16.mxu0 0
  %505 = vmatmul.mubr.bf16.gmra.mrb[0].mxu0 %v461
  %v506 = vpop.f32.mrb[0].mxu0
  %v507 = vadd.f32 0.0, %v506
  %v508 = vpop.f32.mrb[0].mxu0
  %v509 = vpop.f32.mrb[0].mxu0
  %v510 = vadd.f32 0.0, %v509
  %v511 = vpop.f32.mrb[0].mxu0
  %512 = vmatprep.mubr.bf16.mxu0 0
  %513 = vmatmul.mubr.bf16.gmra.mrb[0].mxu0 %v464
  %v514 = vpop.f32.mrb[0].mxu0
  %v515 = vadd.f32 0.0, %v514
  %v516 = vpop.f32.mrb[0].mxu0
  %v517 = vpop.f32.mrb[0].mxu0
  %v518 = vadd.f32 0.0, %v517
  %v519 = vpop.f32.mrb[0].mxu0
  %520 = vmatprep.mubr.bf16.mxu0 0
  %521 = vmatmul.mubr.bf16.gmra.mrb[0].mxu0 %v467
  %v522 = vpop.f32.mrb[0].mxu0
  %v523 = vadd.f32 0.0, %v522
  %v524 = vpop.f32.mrb[0].mxu0
  %v525 = vpop.f32.mrb[0].mxu0
  %v526 = vadd.f32 0.0, %v525
  %v527 = vpop.f32.mrb[0].mxu0
  %528 = vmatprep.mubr.bf16.mxu0 0
  %529 = vmatmul.mubr.bf16.gmra.mrb[0].mxu0 %v470
  %v530 = vpop.f32.mrb[0].mxu0
  %v531 = vadd.f32 0.0, %v530
  %v532 = vpop.f32.mrb[0].mxu0
  %v533 = vpop.f32.mrb[0].mxu0
  %v534 = vadd.f32 0.0, %v533
  %v535 = vpop.f32.mrb[0].mxu0
  %536 = vdwg.mxu0
  %v545 = vunpack.c.l.b16 %v359
  %v546 = vunpack.c.h.b16 %v359
  %v547 = vunpack.c.l.b16 %v361
  %v548 = vunpack.c.h.b16 %v361
  %v549 = vunpack.c.l.b16 %v363
  %v550 = vunpack.c.h.b16 %v363
  %v551 = vunpack.c.l.b16 %v365
  %v552 = vunpack.c.h.b16 %v365
  %v553 = vunpack.c.l.b16 %v367
  %v554 = vunpack.c.h.b16 %v367
  %v555 = vunpack.c.l.b16 %v369
  %v556 = vunpack.c.h.b16 %v369
  %v557 = vunpack.c.l.b16 %v371
  %v558 = vunpack.c.h.b16 %v371
  %v559 = vunpack.c.l.b16 %v373
  %v560 = vunpack.c.h.b16 %v373
  %v561 = vpack.c.b16 %v547, %v545
  %v562 = vpack.c.b16 %v548, %v546
  %v563 = vpack.c.b16 %v551, %v549
  %v564 = vpack.c.b16 %v552, %v550
  %v565 = vpack.c.b16 %v555, %v553
  %v566 = vpack.c.b16 %v556, %v554
  %v567 = vpack.c.b16 %v559, %v557
  %v568 = vpack.c.b16 %v560, %v558
  %v609 = vunpack.c.l.b16 %v375
  %v610 = vunpack.c.l.b16 %v376
  %v611 = vunpack.c.l.b16 %v377
  %v612 = vunpack.c.l.b16 %v378
  %v613 = vunpack.c.l.b16 %v379
  %v614 = vunpack.c.l.b16 %v380
  %v615 = vunpack.c.l.b16 %v381
  %v616 = vunpack.c.l.b16 %v382
  %v617 = vunpack.c.l.b16 %v383
  %v618 = vunpack.c.l.b16 %v384
  %v619 = vunpack.c.l.b16 %v385
  %v620 = vunpack.c.l.b16 %v386
  %v621 = vunpack.c.l.b16 %v387
  %v622 = vunpack.c.l.b16 %v388
  %v623 = vunpack.c.l.b16 %v389
  %v624 = vunpack.c.l.b16 %v390
  %v625 = vunpack.c.l.b16 %v391
  %v626 = vunpack.c.l.b16 %v392
  %v627 = vunpack.c.l.b16 %v393
  %v628 = vunpack.c.l.b16 %v394
  %v629 = vunpack.c.l.b16 %v395
  %v630 = vunpack.c.l.b16 %v396
  %v631 = vunpack.c.l.b16 %v397
  %v632 = vunpack.c.l.b16 %v398
  %v633 = vunpack.c.l.b16 %v399
  %v634 = vunpack.c.l.b16 %v400
  %v635 = vunpack.c.l.b16 %v401
  %v636 = vunpack.c.l.b16 %v402
  %v637 = vunpack.c.l.b16 %v403
  %v638 = vunpack.c.l.b16 %v404
  %v639 = vunpack.c.l.b16 %v405
  %v640 = vunpack.c.l.b16 %v406
  %v641 = vpack.c.b16 %v610, %v609
  %v642 = vpack.c.b16 %v612, %v611
  %v643 = vpack.c.b16 %v614, %v613
  %v644 = vpack.c.b16 %v616, %v615
  %v645 = vpack.c.b16 %v618, %v617
  %v646 = vpack.c.b16 %v620, %v619
  %v647 = vpack.c.b16 %v622, %v621
  %v648 = vpack.c.b16 %v624, %v623
  %v649 = vpack.c.b16 %v626, %v625
  %v650 = vpack.c.b16 %v628, %v627
  %v651 = vpack.c.b16 %v630, %v629
  %v652 = vpack.c.b16 %v632, %v631
  %v653 = vpack.c.b16 %v634, %v633
  %v654 = vpack.c.b16 %v636, %v635
  %v655 = vpack.c.b16 %v638, %v637
  %v656 = vpack.c.b16 %v640, %v639
  %673 = vmatprep.subr.bf16.mxu0 0
  %674 = vmatpush1.bf16.msra.mxu0 %v641
  %675 = vmatprep.subr.bf16.mxu0 0
  %676 = vmatpush1.bf16.msra.mxu0 %v642
  %677 = vmatprep.subr.bf16.mxu0 0
  %678 = vmatpush1.bf16.msra.mxu0 %v643
  %679 = vmatprep.subr.bf16.mxu0 0
  %680 = vmatpush1.bf16.msra.mxu0 %v644
  %681 = vmatprep.subr.bf16.mxu0 0
  %682 = vmatpush1.bf16.msra.mxu0 %v645
  %683 = vmatprep.subr.bf16.mxu0 0
  %684 = vmatpush1.bf16.msra.mxu0 %v646
  %685 = vmatprep.subr.bf16.mxu0 0
  %686 = vmatpush1.bf16.msra.mxu0 %v647
  %687 = vmatprep.subr.bf16.mxu0 0
  %688 = vmatpush1.bf16.msra.mxu0 %v648
  %689 = vmatprep.subr.bf16.mxu0 0
  %690 = vmatpush1.bf16.msra.mxu0 %v649
  %691 = vmatprep.subr.bf16.mxu0 0
  %692 = vmatpush1.bf16.msra.mxu0 %v650
  %693 = vmatprep.subr.bf16.mxu0 0
  %694 = vmatpush1.bf16.msra.mxu0 %v651
  %695 = vmatprep.subr.bf16.mxu0 0
  %696 = vmatpush1.bf16.msra.mxu0 %v652
  %697 = vmatprep.subr.bf16.mxu0 0
  %698 = vmatpush1.bf16.msra.mxu0 %v653
  %699 = vmatprep.subr.bf16.mxu0 0
  %700 = vmatpush1.bf16.msra.mxu0 %v654
  %701 = vmatprep.subr.bf16.mxu0 0
  %702 = vmatpush1.bf16.msra.mxu0 %v655
  %703 = vmatprep.subr.bf16.mxu0 0
  %704 = vmatpush1.bf16.msra.mxu0 %v656
  %705 = vmatprep.mubr.bf16.mxu0 %v562
  %706 = vmatmul.mubr.bf16.gmra.mrb[0].mxu0 %v561
  %v707 = vpop.f32.mrb[0].mxu0
  %v708 = vadd.f32 %v507, %v707
  %v709 = vpop.f32.mrb[0].mxu0
  %v710 = vpop.f32.mrb[0].mxu0
  %v711 = vadd.f32 %v510, %v710
  %v712 = vpop.f32.mrb[0].mxu0
  %713 = vmatprep.mubr.bf16.mxu0 %v564
  %714 = vmatmul.mubr.bf16.gmra.mrb[0].mxu0 %v563
  %v715 = vpop.f32.mrb[0].mxu0
  %v716 = vadd.f32 %v515, %v715
  %v717 = vpop.f32.mrb[0].mxu0
  %v718 = vpop.f32.mrb[0].mxu0
  %v719 = vadd.f32 %v518, %v718
  %v720 = vpop.f32.mrb[0].mxu0
  %721 = vmatprep.mubr.bf16.mxu0 %v566
  %722 = vmatmul.mubr.bf16.gmra.mrb[0].mxu0 %v565
  %v723 = vpop.f32.mrb[0].mxu0
  %v724 = vadd.f32 %v523, %v723
  %v725 = vpop.f32.mrb[0].mxu0
  %v726 = vpop.f32.mrb[0].mxu0
  %v727 = vadd.f32 %v526, %v726
  %v728 = vpop.f32.mrb[0].mxu0
  %729 = vmatprep.mubr.bf16.mxu0 %v568
  %730 = vmatmul.mubr.bf16.gmra.mrb[0].mxu0 %v567
  %v731 = vpop.f32.mrb[0].mxu0
  %v732 = vadd.f32 %v531, %v731
  %v733 = vpop.f32.mrb[0].mxu0
  %v734 = vpop.f32.mrb[0].mxu0
  %v735 = vadd.f32 %v534, %v734
  %v736 = vpop.f32.mrb[0].mxu0
  %737 = vdwg.mxu0
  %v738 = vld [vmem:[%s4] sm:$0x1]
  %v740 = vlaneseq
  %v741 = vshrl.u32 %v740, 7
  %v742 = vsub.s32 0, %v741
  %v743 = vrot.slane %v738, %v742
  %v745 = vadd.f32 %v708, %v743
  %v746 = vadd.f32 %v711, %v743
  %v747 = vadd.f32 %v716, %v743
  %v748 = vadd.f32 %v719, %v743
  %v749 = vadd.f32 %v724, %v743
  %v750 = vadd.f32 %v727, %v743
  %v751 = vadd.f32 %v732, %v743
  %v752 = vadd.f32 %v735, %v743
  %v753 = vmax.f32 %v745, 0.0
  %v754 = vmax.f32 %v746, 0.0
  %v755 = vmax.f32 %v747, 0.0
  %v756 = vmax.f32 %v748, 0.0
  %v757 = vmax.f32 %v749, 0.0
  %v758 = vmax.f32 %v750, 0.0
  %v759 = vmax.f32 %v751, 0.0
  %v760 = vmax.f32 %v752, 0.0
  %v761 = vmax.f32 %v753, %v754
  %v762 = vmax.f32 %v755, %v756
  %v763 = vmax.f32 %v757, %v758
  %v764 = vmax.f32 %v759, %v760
  %v765 = vpack.c.bf16 %v762, %v761
  %v766 = vpack.c.bf16 %v764, %v763
  %v767 = vld [vmem:[%s5] sm:$0xff]
  %v768 = vld [vmem:[%s5 + $0x8] sm:$0xff]
  %v769 = vld [vmem:[%s5 + $0x10] sm:$0xff]
  %v770 = vld [vmem:[%s5 + $0x18] sm:$0xff]
  %v771 = vld [vmem:[%s5 + $0x20] sm:$0xff]
  %v772 = vld [vmem:[%s5 + $0x28] sm:$0xff]
  %v773 = vld [vmem:[%s5 + $0x30] sm:$0xff]
  %v774 = vld [vmem:[%s5 + $0x38] sm:$0xff]
  %v775 = vld [vmem:[%s7] sm:$0x3]
  %v777 = vlaneseq
  %v778 = vshrl.u32 %v777, 7
  %v779 = vsub.s32 0, %v778
  %v780 = vrot.slane %v775, %v779
  %v781 = vlaneseq
  %v782 = vshrl.u32 %v781, 7
  %v783 = vsub.s32 1, %v782
  %v784 = vrot.slane %v775, %v783
  %v795 = vunpack.c.l.b16 %v767
  %v796 = vunpack.c.h.b16 %v767
  %v797 = vunpack.c.l.b16 %v768
  %v798 = vunpack.c.h.b16 %v768
  %v799 = vunpack.c.l.b16 %v769
  %v800 = vunpack.c.h.b16 %v769
  %v801 = vunpack.c.l.b16 %v770
  %v802 = vunpack.c.h.b16 %v770
  %v803 = vunpack.c.l.b16 %v771
  %v804 = vunpack.c.h.b16 %v771
  %v805 = vunpack.c.l.b16 %v772
  %v806 = vunpack.c.h.b16 %v772
  %v807 = vunpack.c.l.b16 %v773
  %v808 = vunpack.c.h.b16 %v773
  %v809 = vunpack.c.l.b16 %v774
  %v810 = vunpack.c.h.b16 %v774
  %v811 = vpack.c.b16 %v797, %v795
  %v812 = vpack.c.b16 %v798, %v796
  %v813 = vpack.c.b16 %v801, %v799
  %v814 = vpack.c.b16 %v802, %v800
  %v815 = vpack.c.b16 %v805, %v803
  %v816 = vpack.c.b16 %v806, %v804
  %v817 = vpack.c.b16 %v809, %v807
  %v818 = vpack.c.b16 %v810, %v808
  %v828 = vsel %vm459, %v765, 0
  %v831 = vsel %vm459, %v766, 0
  %833 = vmatprep.subr.bf16.mxu0 %v812
  %834 = vmatpush1.bf16.msra.mxu0 %v811
  %835 = vmatprep.subr.bf16.mxu0 %v814
  %836 = vmatpush1.bf16.msra.mxu0 %v813
  %837 = vmatprep.subr.bf16.mxu0 %v816
  %838 = vmatpush1.bf16.msra.mxu0 %v815
  %839 = vmatprep.subr.bf16.mxu0 %v818
  %840 = vmatpush1.bf16.msra.mxu0 %v817
  %841 = vmatprep.subr.bf16.mxu0 0
  %842 = vmatpush1.bf16.msra.mxu0 0
  %843 = vmatprep.subr.bf16.mxu0 0
  %844 = vmatpush1.bf16.msra.mxu0 0
  %845 = vmatprep.subr.bf16.mxu0 0
  %846 = vmatpush1.bf16.msra.mxu0 0
  %847 = vmatprep.subr.bf16.mxu0 0
  %848 = vmatpush1.bf16.msra.mxu0 0
  %849 = vmatprep.subr.bf16.mxu0 0
  %850 = vmatpush1.bf16.msra.mxu0 0
  %851 = vmatprep.subr.bf16.mxu0 0
  %852 = vmatpush1.bf16.msra.mxu0 0
  %853 = vmatprep.subr.bf16.mxu0 0
  %854 = vmatpush1.bf16.msra.mxu0 0
  %855 = vmatprep.subr.bf16.mxu0 0
  %856 = vmatpush1.bf16.msra.mxu0 0
  %857 = vmatprep.subr.bf16.mxu0 0
  %858 = vmatpush1.bf16.msra.mxu0 0
  %859 = vmatprep.subr.bf16.mxu0 0
  %860 = vmatpush1.bf16.msra.mxu0 0
  %861 = vmatprep.subr.bf16.mxu0 0
  %862 = vmatpush1.bf16.msra.mxu0 0
  %863 = vmatprep.subr.bf16.mxu0 0
  %864 = vmatpush1.bf16.msra.mxu0 0
  %865 = vmatprep.mubr.bf16.mxu0 0
  %866 = vmatmul.mubr.bf16.gmra.mrb[0].mxu0 %v828
  %v867 = vpop.f32.mrb[0].mxu0
  %v868 = vadd.f32 %v780, %v867
  %v869 = vpop.f32.mrb[0].mxu0
  %v870 = vadd.f32 %v784, %v869
  %v871 = vpop.f32.mrb[0].mxu0
  %v872 = vadd.f32 %v780, %v871
  %v873 = vpop.f32.mrb[0].mxu0
  %v874 = vadd.f32 %v784, %v873
  %875 = vmatprep.mubr.bf16.mxu0 0
  %876 = vmatmul.mubr.bf16.gmra.mrb[0].mxu0 %v831
  %v877 = vpop.f32.mrb[0].mxu0
  %v878 = vadd.f32 %v780, %v877
  %v879 = vpop.f32.mrb[0].mxu0
  %v880 = vadd.f32 %v784, %v879
  %v881 = vpop.f32.mrb[0].mxu0
  %v882 = vadd.f32 %v780, %v881
  %v883 = vpop.f32.mrb[0].mxu0
  %v884 = vadd.f32 %v784, %v883
  %885 = vdwg.mxu0
  %886 = vst [vmem:[#allocation3] sm:$0xff] %v868
  %887 = vst [vmem:[#allocation3 + $0x8] sm:$0xff] %v870
  %888 = vst [vmem:[#allocation3 + $0x10] sm:$0xff] %v872
  %889 = vst [vmem:[#allocation3 + $0x18] sm:$0xff] %v874
  %890 = vst [vmem:[#allocation3 + $0x20] sm:$0xff] %v878
  %891 = vst [vmem:[#allocation3 + $0x28] sm:$0xff] %v880
  %892 = vst [vmem:[#allocation3 + $0x30] sm:$0xff] %v882
  %893 = vst [vmem:[#allocation3 + $0x38] sm:$0xff] %v884
  %v894 = vld [vmem:[%s6] sm:$0xff]
  %v895 = vld [vmem:[%s6 + $0x8] sm:$0xff]
  %v896 = vld [vmem:[%s6 + $0x10] sm:$0xff]
  %v897 = vld [vmem:[%s6 + $0x18] sm:$0xff]
  %v898 = vld [vmem:[%s6 + $0x20] sm:$0xff]
  %v899 = vld [vmem:[%s6 + $0x28] sm:$0xff]
  %v900 = vld [vmem:[%s6 + $0x30] sm:$0xff]
  %v901 = vld [vmem:[%s6 + $0x38] sm:$0xff]
  %v902 = vld [vmem:[#allocation3] sm:$0xff]
  %v903 = vld [vmem:[#allocation3 + $0x8] sm:$0xff]
  %v912 = vunpack.c.l.b16 %v894
  %v913 = vunpack.c.h.b16 %v894
  %v914 = vunpack.c.l.b16 %v895
  %v915 = vunpack.c.h.b16 %v895
  %v916 = vunpack.c.l.b16 %v896
  %v917 = vunpack.c.h.b16 %v896
  %v918 = vunpack.c.l.b16 %v897
  %v919 = vunpack.c.h.b16 %v897
  %v920 = vunpack.c.l.b16 %v898
  %v921 = vunpack.c.h.b16 %v898
  %v922 = vunpack.c.l.b16 %v899
  %v923 = vunpack.c.h.b16 %v899
  %v924 = vunpack.c.l.b16 %v900
  %v925 = vunpack.c.h.b16 %v900
  %v926 = vunpack.c.l.b16 %v901
  %v927 = vunpack.c.h.b16 %v901
  %v928 = vpack.c.b16 %v914, %v912
  %v929 = vpack.c.b16 %v915, %v913
  %v930 = vpack.c.b16 %v918, %v916
  %v931 = vpack.c.b16 %v919, %v917
  %v932 = vpack.c.b16 %v922, %v920
  %v933 = vpack.c.b16 %v923, %v921
  %v934 = vpack.c.b16 %v926, %v924
  %v935 = vpack.c.b16 %v927, %v925
  %v945 = vsel %vm459, 0, 0
  %947 = vmatprep.subr.bf16.mxu0 %v929
  %948 = vmatpush1.bf16.msra.mxu0 %v928
  %949 = vmatprep.subr.bf16.mxu0 %v931
  %950 = vmatpush1.bf16.msra.mxu0 %v930
  %951 = vmatprep.subr.bf16.mxu0 %v933
  %952 = vmatpush1.bf16.msra.mxu0 %v932
  %953 = vmatprep.subr.bf16.mxu0 %v935
  %954 = vmatpush1.bf16.msra.mxu0 %v934
  %955 = vmatprep.subr.bf16.mxu0 0
  %956 = vmatpush1.bf16.msra.mxu0 0
  %957 = vmatprep.subr.bf16.mxu0 0
  %958 = vmatpush1.bf16.msra.mxu0 0
  %959 = vmatprep.subr.bf16.mxu0 0
  %960 = vmatpush1.bf16.msra.mxu0 0
  %961 = vmatprep.subr.bf16.mxu0 0
  %962 = vmatpush1.bf16.msra.mxu0 0
  %963 = vmatprep.subr.bf16.mxu0 0
  %964 = vmatpush1.bf16.msra.mxu0 0
  %965 = vmatprep.subr.bf16.mxu0 0
  %966 = vmatpush1.bf16.msra.mxu0 0
  %967 = vmatprep.subr.bf16.mxu0 0
  %968 = vmatpush1.bf16.msra.mxu0 0
  %969 = vmatprep.subr.bf16.mxu0 0
  %970 = vmatpush1.bf16.msra.mxu0 0
  %971 = vmatprep.subr.bf16.mxu0 0
  %972 = vmatpush1.bf16.msra.mxu0 0
  %973 = vmatprep.subr.bf16.mxu0 0
  %974 = vmatpush1.bf16.msra.mxu0 0
  %975 = vmatprep.subr.bf16.mxu0 0
  %976 = vmatpush1.bf16.msra.mxu0 0
  %977 = vmatprep.subr.bf16.mxu0 0
  %978 = vmatpush1.bf16.msra.mxu0 0
  %979 = vmatprep.mubr.bf16.mxu0 0
  %980 = vmatmul.mubr.bf16.gmra.mrb[0].mxu0 %v945
  %v981 = vpop.f32.mrb[0].mxu0
  %v982 = vadd.f32 0.0, %v981
  %v983 = vpop.f32.mrb[0].mxu0
  %v984 = vadd.f32 0.0, %v983
  %v985 = vpop.f32.mrb[0].mxu0
  %v986 = vpop.f32.mrb[0].mxu0
  %987 = vdwg.mxu0
  %v988 = vadd.f32 %v902, %v982
  %v989 = vadd.f32 %v903, %v984
  %v990 = vxor.u32 %v988, 2147483648
  %v991 = vxor.u32 %v989, 2147483648
  %v992 = vmul.f32 %v990, 1.442695
  %v993 = vpow.pop %v992
  %v994 = vmul.f32 %v991, 1.442695
  %v995 = vpow.pop %v994
  %v996 = vadd.f32 %v993, 1.0
  %v997 = vadd.f32 %v995, 1.0
  %v998 = vrcp.pop %v996
  %v999 = vmul.f32 1.0, %v998
  %v1000 = vrcp.pop %v997
  %v1001 = vmul.f32 1.0, %v1000
  %v1002 = vtanh.pop %v989
  %v1003 = vmul.f32 %v999, 0.0
  %1005 = vrot.lane.b32.xlu0 %v1002, 64
  %v1006 = vpop.permute.xlu0 %1005
  %v1008 = vmul.f32 %v999, %v1006
  %1010 = vrot.lane.b32.xlu0 %v1008, 64
  %v1011 = vpop.permute.xlu0 %1010
  %v1013 = vadd.f32 %v1003, %v1011
  %v1014 = vtanh.pop %v1013
  %1016 = vrot.lane.b32.xlu0 %v1014, 64
  %v1017 = vpop.permute.xlu0 %1016
  %v1019 = vmul.f32 %v1001, %v1017
  %s1020 = scalar_lea.vmem [#allocation3], 16
  %v1021 = vld [vmem:[%s1020] sm:$0xff]
  %v1022 = vld [vmem:[%s1020 + $0x8] sm:$0xff]
  %v1023 = vpack.c.bf16 %v1019, %v1019
  %v1025 = vsel %vm459, %v1023, 0
  %1027 = vmatprep.subr.bf16.mxu0 %v929
  %1028 = vmatpush1.bf16.msra.mxu0 %v928
  %1029 = vmatprep.subr.bf16.mxu0 %v931
  %1030 = vmatpush1.bf16.msra.mxu0 %v930
  %1031 = vmatprep.subr.bf16.mxu0 %v933
  %1032 = vmatpush1.bf16.msra.mxu0 %v932
  %1033 = vmatprep.subr.bf16.mxu0 %v935
  %1034 = vmatpush1.bf16.msra.mxu0 %v934
  %1035 = vmatprep.subr.bf16.mxu0 0
  %1036 = vmatpush1.bf16.msra.mxu0 0
  %1037 = vmatprep.subr.bf16.mxu0 0
  %1038 = vmatpush1.bf16.msra.mxu0 0
  %1039 = vmatprep.subr.bf16.mxu0 0
  %1040 = vmatpush1.bf16.msra.mxu0 0
  %1041 = vmatprep.subr.bf16.mxu0 0
  %1042 = vmatpush1.bf16.msra.mxu0 0
  %1043 = vmatprep.subr.bf16.mxu0 0
  %1044 = vmatpush1.bf16.msra.mxu0 0
  %1045 = vmatprep.subr.bf16.mxu0 0
  %1046 = vmatpush1.bf16.msra.mxu0 0
  %1047 = vmatprep.subr.bf16.mxu0 0
  %1048 = vmatpush1.bf16.msra.mxu0 0
  %1049 = vmatprep.subr.bf16.mxu0 0
  %1050 = vmatpush1.bf16.msra.mxu0 0
  %1051 = vmatprep.subr.bf16.mxu0 0
  %1052 = vmatpush1.bf16.msra.mxu0 0
  %1053 = vmatprep.subr.bf16.mxu0 0
  %1054 = vmatpush1.bf16.msra.mxu0 0
  %1055 = vmatprep.subr.bf16.mxu0 0
  %1056 = vmatpush1.bf16.msra.mxu0 0
  %1057 = vmatprep.subr.bf16.mxu0 0
  %1058 = vmatpush1.bf16.msra.mxu0 0
  %1059 = vmatprep.mubr.bf16.mxu0 0
  %1060 = vmatmul.mubr.bf16.gmra.mrb[0].mxu0 %v1025
  %v1061 = vpop.f32.mrb[0].mxu0
  %v1062 = vadd.f32 0.0, %v1061
  %v1063 = vpop.f32.mrb[0].mxu0
  %v1064 = vadd.f32 0.0, %v1063
  %v1065 = vpop.f32.mrb[0].mxu0
  %v1066 = vpop.f32.mrb[0].mxu0
  %1067 = vdwg.mxu0
  %v1068 = vadd.f32 %v1021, %v1062
  %v1069 = vadd.f32 %v1022, %v1064
  %v1070 = vxor.u32 %v1068, 2147483648
  %v1071 = vxor.u32 %v1069, 2147483648
  %v1072 = vmul.f32 %v1070, 1.442695
  %v1073 = vpow.pop %v1072
  %v1074 = vmul.f32 %v1071, 1.442695
  %v1075 = vpow.pop %v1074
  %v1076 = vadd.f32 %v1073, 1.0
  %v1077 = vadd.f32 %v1075, 1.0
  %v1078 = vrcp.pop %v1076
  %v1079 = vmul.f32 1.0, %v1078
  %v1080 = vrcp.pop %v1077
  %v1081 = vmul.f32 1.0, %v1080
  %v1082 = vtanh.pop %v1069
  %v1083 = vmul.f32 %v1079, %v1013
  %1085 = vrot.lane.b32.xlu0 %v1082, 64
  %v1086 = vpop.permute.xlu0 %1085
  %v1088 = vmul.f32 %v1079, %v1086
  %1090 = vrot.lane.b32.xlu0 %v1088, 64
  %v1091 = vpop.permute.xlu0 %1090
  %v1093 = vadd.f32 %v1083, %v1091
  %v1094 = vtanh.pop %v1093
  %1096 = vrot.lane.b32.xlu0 %v1094, 64
  %v1097 = vpop.permute.xlu0 %1096
  %v1099 = vmul.f32 %v1081, %v1097
  %s1100 = scalar_lea.vmem [#allocation3], 32
  %v1101 = vld [vmem:[%s1100] sm:$0xff]
  %v1102 = vld [vmem:[%s1100 + $0x8] sm:$0xff]
  %v1103 = vpack.c.bf16 %v1099, %v1099
  %v1105 = vsel %vm459, %v1103, 0
  %1107 = vmatprep.subr.bf16.mxu0 %v929
  %1108 = vmatpush1.bf16.msra.mxu0 %v928
  %1109 = vmatprep.subr.bf16.mxu0 %v931
  %1110 = vmatpush1.bf16.msra.mxu0 %v930
  %1111 = vmatprep.subr.bf16.mxu0 %v933
  %1112 = vmatpush1.bf16.msra.mxu0 %v932
  %1113 = vmatprep.subr.bf16.mxu0 %v935
  %1114 = vmatpush1.bf16.msra.mxu0 %v934
  %1115 = vmatprep.subr.bf16.mxu0 0
  %1116 = vmatpush1.bf16.msra.mxu0 0
  %1117 = vmatprep.subr.bf16.mxu0 0
  %1118 = vmatpush1.bf16.msra.mxu0 0
  %1119 = vmatprep.subr.bf16.mxu0 0
  %1120 = vmatpush1.bf16.msra.mxu0 0
  %1121 = vmatprep.subr.bf16.mxu0 0
  %1122 = vmatpush1.bf16.msra.mxu0 0
  %1123 = vmatprep.subr.bf16.mxu0 0
  %1124 = vmatpush1.bf16.msra.mxu0 0
  %1125 = vmatprep.subr.bf16.mxu0 0
  %1126 = vmatpush1.bf16.msra.mxu0 0
  %1127 = vmatprep.subr.bf16.mxu0 0
  %1128 = vmatpush1.bf16.msra.mxu0 0
  %1129 = vmatprep.subr.bf16.mxu0 0
  %1130 = vmatpush1.bf16.msra.mxu0 0
  %1131 = vmatprep.subr.bf16.mxu0 0
  %1132 = vmatpush1.bf16.msra.mxu0 0
  %1133 = vmatprep.subr.bf16.mxu0 0
  %1134 = vmatpush1.bf16.msra.mxu0 0
  %1135 = vmatprep.subr.bf16.mxu0 0
  %1136 = vmatpush1.bf16.msra.mxu0 0
  %1137 = vmatprep.subr.bf16.mxu0 0
  %1138 = vmatpush1.bf16.msra.mxu0 0
  %1139 = vmatprep.mubr.bf16.mxu0 0
  %1140 = vmatmul.mubr.bf16.gmra.mrb[0].mxu0 %v1105
  %v1141 = vpop.f32.mrb[0].mxu0
  %v1142 = vadd.f32 0.0, %v1141
  %v1143 = vpop.f32.mrb[0].mxu0
  %v1144 = vadd.f32 0.0, %v1143
  %v1145 = vpop.f32.mrb[0].mxu0
  %v1146 = vpop.f32.mrb[0].mxu0
  %1147 = vdwg.mxu0
  %v1148 = vadd.f32 %v1101, %v1142
  %v1149 = vadd.f32 %v1102, %v1144
  %v1150 = vxor.u32 %v1148, 2147483648
  %v1151 = vxor.u32 %v1149, 2147483648
  %v1152 = vmul.f32 %v1150, 1.442695
  %v1153 = vpow.pop %v1152
  %v1154 = vmul.f32 %v1151, 1.442695
  %v1155 = vpow.pop %v1154
  %v1156 = vadd.f32 %v1153, 1.0
  %v1157 = vadd.f32 %v1155, 1.0
  %v1158 = vrcp.pop %v1156
  %v1159 = vmul.f32 1.0, %v1158
  %v1160 = vrcp.pop %v1157
  %v1161 = vmul.f32 1.0, %v1160
  %v1162 = vtanh.pop %v1149
  %v1163 = vmul.f32 %v1159, %v1093
  %1165 = vrot.lane.b32.xlu0 %v1162, 64
  %v1166 = vpop.permute.xlu0 %1165
  %v1168 = vmul.f32 %v1159, %v1166
  %1170 = vrot.lane.b32.xlu0 %v1168, 64
  %v1171 = vpop.permute.xlu0 %1170
  %v1173 = vadd.f32 %v1163, %v1171
  %v1174 = vtanh.pop %v1173
  %1176 = vrot.lane.b32.xlu0 %v1174, 64
  %v1177 = vpop.permute.xlu0 %1176
  %v1179 = vmul.f32 %v1161, %v1177
  %s1180 = scalar_lea.vmem [#allocation3], 48
  %v1181 = vld [vmem:[%s1180] sm:$0xff]
  %v1182 = vld [vmem:[%s1180 + $0x8] sm:$0xff]
  %v1183 = vpack.c.bf16 %v1179, %v1179
  %v1185 = vsel %vm459, %v1183, 0
  %1187 = vmatprep.subr.bf16.mxu0 %v929
  %1188 = vmatpush1.bf16.msra.mxu0 %v928
  %1189 = vmatprep.subr.bf16.mxu0 %v931
  %1190 = vmatpush1.bf16.msra.mxu0 %v930
  %1191 = vmatprep.subr.bf16.mxu0 %v933
  %1192 = vmatpush1.bf16.msra.mxu0 %v932
  %1193 = vmatprep.subr.bf16.mxu0 %v935
  %1194 = vmatpush1.bf16.msra.mxu0 %v934
  %1195 = vmatprep.subr.bf16.mxu0 0
  %1196 = vmatpush1.bf16.msra.mxu0 0
  %1197 = vmatprep.subr.bf16.mxu0 0
  %1198 = vmatpush1.bf16.msra.mxu0 0
  %1199 = vmatprep.subr.bf16.mxu0 0
  %1200 = vmatpush1.bf16.msra.mxu0 0
  %1201 = vmatprep.subr.bf16.mxu0 0
  %1202 = vmatpush1.bf16.msra.mxu0 0
  %1203 = vmatprep.subr.bf16.mxu0 0
  %1204 = vmatpush1.bf16.msra.mxu0 0
  %1205 = vmatprep.subr.bf16.mxu0 0
  %1206 = vmatpush1.bf16.msra.mxu0 0
  %1207 = vmatprep.subr.bf16.mxu0 0
  %1208 = vmatpush1.bf16.msra.mxu0 0
  %1209 = vmatprep.subr.bf16.mxu0 0
  %1210 = vmatpush1.bf16.msra.mxu0 0
  %1211 = vmatprep.subr.bf16.mxu0 0
  %1212 = vmatpush1.bf16.msra.mxu0 0
  %1213 = vmatprep.subr.bf16.mxu0 0
  %1214 = vmatpush1.bf16.msra.mxu0 0
  %1215 = vmatprep.subr.bf16.mxu0 0
  %1216 = vmatpush1.bf16.msra.mxu0 0
  %1217 = vmatprep.subr.bf16.mxu0 0
  %1218 = vmatpush1.bf16.msra.mxu0 0
  %1219 = vmatprep.mubr.bf16.mxu0 0
  %1220 = vmatmul.mubr.bf16.gmra.mrb[0].mxu0 %v1185
  %v1221 = vpop.f32.mrb[0].mxu0
  %v1222 = vadd.f32 0.0, %v1221
  %v1223 = vpop.f32.mrb[0].mxu0
  %v1224 = vadd.f32 0.0, %v1223
  %v1225 = vpop.f32.mrb[0].mxu0
  %v1226 = vpop.f32.mrb[0].mxu0
  %1227 = vdwg.mxu0
  %v1228 = vadd.f32 %v1181, %v1222
  %v1229 = vadd.f32 %v1182, %v1224
  %v1230 = vxor.u32 %v1228, 2147483648
  %v1231 = vxor.u32 %v1229, 2147483648
  %v1232 = vmul.f32 %v1230, 1.442695
  %v1233 = vpow.pop %v1232
  %v1234 = vmul.f32 %v1231, 1.442695
  %v1235 = vpow.pop %v1234
  %v1236 = vadd.f32 %v1233, 1.0
  %v1237 = vadd.f32 %v1235, 1.0
  %v1238 = vrcp.pop %v1236
  %v1239 = vmul.f32 1.0, %v1238
  %v1240 = vrcp.pop %v1237
  %v1241 = vmul.f32 1.0, %v1240
  %v1242 = vtanh.pop %v1229
  %v1243 = vmul.f32 %v1239, %v1173
  %1245 = vrot.lane.b32.xlu0 %v1242, 64
  %v1246 = vpop.permute.xlu0 %1245
  %v1248 = vmul.f32 %v1239, %v1246
  %1250 = vrot.lane.b32.xlu0 %v1248, 64
  %v1251 = vpop.permute.xlu0 %1250
  %v1253 = vadd.f32 %v1243, %v1251
  %v1254 = vtanh.pop %v1253
  %1256 = vrot.lane.b32.xlu0 %v1254, 64
  %v1257 = vpop.permute.xlu0 %1256
  %v1259 = vmul.f32 %v1241, %v1257
  %v1260 = vpack.c.bf16 %v1259, %v1259
  %v1261 = vld [vmem:[%s8] sm:$0xf]
  %v1262 = vld [vmem:[%s8 + $0x4] sm:$0xf]
  %v1263 = vld [vmem:[%s8 + $0x8] sm:$0xf]
  %v1264 = vld [vmem:[%s8 + $0xc] sm:$0xf]
  %v1265 = vld [vmem:[%s8 + $0x10] sm:$0xf]
  %v1266 = vld [vmem:[%s8 + $0x14] sm:$0xf]
  %v1267 = vld [vmem:[%s8 + $0x18] sm:$0xf]
  %v1268 = vld [vmem:[%s8 + $0x1c] sm:$0xf]
  %v1269 = vld [vmem:[%s9] sm:$0x1]
  %v1271 = vlaneseq
  %v1272 = vshrl.u32 %v1271, 7
  %v1273 = vsub.s32 0, %v1272
  %v1274 = vrot.slane %v1269, %v1273
  %v1284 = vunpack.c.l.b16 %v1261
  %v1285 = vunpack.c.l.b16 %v1262
  %v1286 = vunpack.c.l.b16 %v1263
  %v1287 = vunpack.c.l.b16 %v1264
  %v1288 = vunpack.c.l.b16 %v1265
  %v1289 = vunpack.c.l.b16 %v1266
  %v1290 = vunpack.c.l.b16 %v1267
  %v1291 = vunpack.c.l.b16 %v1268
  %v1292 = vpack.c.b16 %v1285, %v1284
  %v1293 = vpack.c.b16 %v1287, %v1286
  %v1294 = vpack.c.b16 %v1289, %v1288
  %v1295 = vpack.c.b16 %v1291, %v1290
  %v1301 = vsel %vm459, %v1260, 0
  %1303 = vmatprep.subr.bf16.mxu0 0
  %1304 = vmatpush1.bf16.msra.mxu0 %v1292
  %1305 = vmatprep.subr.bf16.mxu0 0
  %1306 = vmatpush1.bf16.msra.mxu0 %v1293
  %1307 = vmatprep.subr.bf16.mxu0 0
  %1308 = vmatpush1.bf16.msra.mxu0 %v1294
  %1309 = vmatprep.subr.bf16.mxu0 0
  %1310 = vmatpush1.bf16.msra.mxu0 %v1295
  %1311 = vmatprep.subr.bf16.mxu0 0
  %1312 = vmatpush1.bf16.msra.mxu0 0
  %1313 = vmatprep.subr.bf16.mxu0 0
  %1314 = vmatpush1.bf16.msra.mxu0 0
  %1315 = vmatprep.subr.bf16.mxu0 0
  %1316 = vmatpush1.bf16.msra.mxu0 0
  %1317 = vmatprep.subr.bf16.mxu0 0
  %1318 = vmatpush1.bf16.msra.mxu0 0
  %1319 = vmatprep.subr.bf16.mxu0 0
  %1320 = vmatpush1.bf16.msra.mxu0 0
  %1321 = vmatprep.subr.bf16.mxu0 0
  %1322 = vmatpush1.bf16.msra.mxu0 0
  %1323 = vmatprep.subr.bf16.mxu0 0
  %1324 = vmatpush1.bf16.msra.mxu0 0
  %1325 = vmatprep.subr.bf16.mxu0 0
  %1326 = vmatpush1.bf16.msra.mxu0 0
  %1327 = vmatprep.subr.bf16.mxu0 0
  %1328 = vmatpush1.bf16.msra.mxu0 0
  %1329 = vmatprep.subr.bf16.mxu0 0
  %1330 = vmatpush1.bf16.msra.mxu0 0
  %1331 = vmatprep.subr.bf16.mxu0 0
  %1332 = vmatpush1.bf16.msra.mxu0 0
  %1333 = vmatprep.subr.bf16.mxu0 0
  %1334 = vmatpush1.bf16.msra.mxu0 0
  %1335 = vmatprep.mubr.bf16.mxu0 0
  %1336 = vmatmul.mubr.bf16.gmra.mrb[0].mxu0 %v1301
  %v1337 = vpop.f32.mrb[0].mxu0
  %v1338 = vadd.f32 %v1274, %v1337
  %v1339 = vpop.f32.mrb[0].mxu0
  %v1340 = vpop.f32.mrb[0].mxu0
  %v1341 = vpop.f32.mrb[0].mxu0
  %1342 = vdwg.mxu0
  %1343 = vst [vmem:[%s10] sm:$0xff] %v1338
  // Predicated region
  $region42: #{_ppg_forward_jit.1} parent=0 // pred_check
    _
  $region43: #{_ppg_forward_jit.1} parent=0 // pred_check_branch
    %1345 = sbr.rel (0) target = $region45
  $region44: #{_ppg_forward_jit.1} parent=0 // pred_region
    _
  $region45: #{_ppg_forward_jit.1} parent=0 // pred_fallthru
    _
  // Predicated region
  $region46: #{_ppg_forward_jit.1} parent=0 // pred_check
    _
  $region47: #{_ppg_forward_jit.1} parent=0 // pred_check_branch
    %1347 = sbr.rel (0) target = $region49
  $region48: #{_ppg_forward_jit.1} parent=0 // pred_region
    _
  $region49: #{_ppg_forward_jit.1} parent=0 // pred_fallthru
    _

</llo_original>
